<compile_context>
chip_gen: v6e
topology: v6e:2x2x1
jax: 0.10.0
libtpu: 0.0.40
codegen_flags: <defaults>
</compile_context>

<pallas_src>
import functools

import jax
import jax.numpy as jnp
from jax.experimental import pallas as pl
from jax.experimental.pallas import tpu as pltpu


# ---------------------------------------------------------------------------
# Pallas kernels
# ---------------------------------------------------------------------------

def _conv_pool_relu_kernel(p_ref, w_ref, b_ref, o_ref):
    """Fused conv (as im2col matmul) + bias + 2x2 maxpool + ReLU.

    p_ref: (4, M, K) bf16  - im2col patches, leading axis = pool-window corner
    w_ref: (K, 128) bf16   - (kh, kw, cin)-ordered weights, K and cout zero-padded
    b_ref: (1, 128) f32    - bias, zero-padded
    o_ref: (M, 128) bf16   - relu(maxpool2x2(conv)+bias), M = pooled positions
    """
    w = w_ref[...]
    y0 = jnp.dot(p_ref[0], w, preferred_element_type=jnp.float32)
    y1 = jnp.dot(p_ref[1], w, preferred_element_type=jnp.float32)
    y2 = jnp.dot(p_ref[2], w, preferred_element_type=jnp.float32)
    y3 = jnp.dot(p_ref[3], w, preferred_element_type=jnp.float32)
    pooled = jnp.maximum(jnp.maximum(y0, y1), jnp.maximum(y2, y3))   # f32 epilogue
    o_ref[...] = jnp.maximum(pooled + b_ref[...], 0.0).astype(o_ref.dtype)


def _fc_fused_kernel(x_ref, w1_ref, b1_ref, w2_ref, b2_ref, o_ref, *, num_valid):
    """Fused fc1 + bias + ReLU + fc2 + bias + log_softmax (padded lanes masked)."""
    h = jnp.dot(x_ref[...], w1_ref[...], preferred_element_type=jnp.float32)
    h = jnp.maximum(h + b1_ref[...], 0.0)
    # dropout: identity in eval mode
    logits = jnp.dot(h.astype(w2_ref.dtype), w2_ref[...],
                     preferred_element_type=jnp.float32) + b2_ref[...]
    col = jax.lax.broadcasted_iota(jnp.int32, logits.shape, 1)
    logits = jnp.where(col < num_valid, logits, jnp.float32(-1e30))   # mask pad lanes
    m = jnp.max(logits, axis=-1, keepdims=True)
    z = logits - m
    lse = jnp.log(jnp.sum(jnp.exp(z), axis=-1, keepdims=True))
    o_ref[...] = (z - lse).astype(o_ref.dtype)


# ---------------------------------------------------------------------------
# pallas_call wrappers
# ---------------------------------------------------------------------------

def conv_pool_relu(patches, w_mat, bias, cout_pad=128):
    """patches: (N, 4, M, K) bf16; w_mat: (K, 128) bf16; bias: (1, 128) f32."""
    N, _, M, K = patches.shape
    return pl.pallas_call(
        _conv_pool_relu_kernel,
        out_shape=jax.ShapeDtypeStruct((N, M, cout_pad), jnp.bfloat16),
        grid=(N,),
        in_specs=[
            pl.BlockSpec((None, 4, M, K), lambda n: (n, 0, 0, 0)),   # per-sample patches
            pl.BlockSpec((K, cout_pad), lambda n: (0, 0)),           # weights (resident)
            pl.BlockSpec((1, cout_pad), lambda n: (0, 0)),           # bias
        ],
        out_specs=pl.BlockSpec((None, M, cout_pad), lambda n: (n, 0, 0)),
        compiler_params=pltpu.CompilerParams(dimension_semantics=("parallel",)),
    )(patches, w_mat, bias)


def fc_fused(x, w1, b1, w2, b2, num_classes):
    """x: (N, 2048) bf16. Both weight mats fit trivially in VMEM -> single block."""
    N = x.shape[0]
    return pl.pallas_call(
        functools.partial(_fc_fused_kernel, num_valid=num_classes),
        out_shape=jax.ShapeDtypeStruct((N, w2.shape[1]), jnp.float32),
    )(x, w1, b1, w2, b2)


# ---------------------------------------------------------------------------
# Glue: pool-grouped im2col (XLA, tiny tensors)
# ---------------------------------------------------------------------------

def _pool_grouped_patches(x_nhwc, k):
    """im2col with (kh, kw, cin) feature ordering, output rows grouped by 2x2
    pool-window corner: returns (N, 4, (OH//2)*(OW//2), k*k*C)."""
    N, H, W, C = x_nhwc.shape
    OH, OW = H - k + 1, W - k + 1
    PH, PW = OH // 2, OW // 2
    cols = [x_nhwc[:, i:i + OH, j:j + OW, :] for i in range(k) for j in range(k)]
    p = jnp.stack(cols, axis=3).reshape(N, OH, OW, k * k * C)
    p = p.reshape(N, PH, 2, PW, 2, k * k * C)
    p = jnp.transpose(p, (0, 2, 4, 1, 3, 5))          # (N, dh, dw, PH, PW, K)
    return p.reshape(N, 4, PH * PW, k * k * C)


def _pad_to(a, shape):
    return jnp.pad(a, [(0, t - s) for s, t in zip(a.shape, shape)])


def _pad_last(a, size):
    return jnp.pad(a, [(0, 0)] * (a.ndim - 1) + [(0, size - a.shape[-1])])


# ---------------------------------------------------------------------------
# Model
# ---------------------------------------------------------------------------

def init_params(key):
    k1, k2, k3, k4, k5, k6, k7, k8 = jax.random.split(key, 8)
    s = 0.1
    return {
        "conv1_w": jax.random.normal(k1, (10, 1, 5, 5), jnp.float32) * s,
        "conv1_b": jax.random.normal(k2, (10,), jnp.float32) * s,
        "conv2_w": jax.random.normal(k3, (20, 10, 5, 5), jnp.float32) * s,
        "conv2_b": jax.random.normal(k4, (20,), jnp.float32) * s,
        # fc1_w rows follow PyTorch's x.view(-1, 320) flatten order (c, h, w).
        "fc1_w":   jax.random.normal(k5, (320, 50), jnp.float32) * s,
        "fc1_b":   jax.random.normal(k6, (50,), jnp.float32) * s,
        "fc2_w":   jax.random.normal(k7, (50, 10), jnp.float32) * s,
        "fc2_b":   jax.random.normal(k8, (10,), jnp.float32) * s,
    }


@jax.jit
def simple_cnn_forward(params, x_nchw):
    """x_nchw: (N, 1, 28, 28) float32 -> log-probs (N, 10)."""
    N = x_nchw.shape[0]
    f32, bf16 = jnp.float32, jnp.bfloat16

    # --- weight prep: (kh, kw, cin, cout) matmul layout, K / cout padded, bf16 ---
    w1 = jnp.transpose(params["conv1_w"], (2, 3, 1, 0)).reshape(25, 10)
    w1 = _pad_to(w1, (32, 128)).astype(bf16)
    b1 = _pad_to(params["conv1_b"].reshape(1, 10), (1, 128)).astype(f32)
    w2 = jnp.transpose(params["conv2_w"], (2, 3, 1, 0)).reshape(250, 20)
    w2 = _pad_to(w2, (256, 128)).astype(bf16)
    b2 = _pad_to(params["conv2_b"].reshape(1, 20), (1, 128)).astype(f32)

    # fc1: remap rows from PyTorch (c*16 + m) order to (m*128 + c) so the conv2
    # kernel's (16 positions x 128 padded channels) output feeds it directly.
    fw1 = params["fc1_w"].reshape(20, 16, 50)           # (c, m, out)
    fw1 = jnp.transpose(fw1, (1, 0, 2))                 # (m, c, out)
    fw1 = jnp.pad(fw1, ((0, 0), (0, 128 - 20), (0, 128 - 50)))
    fw1 = fw1.reshape(16 * 128, 128).astype(bf16)       # (2048, 128)
    fb1 = _pad_to(params["fc1_b"].reshape(1, 50), (1, 128)).astype(f32)
    fw2 = _pad_to(params["fc2_w"], (128, 128)).astype(bf16)
    fb2 = _pad_to(params["fc2_b"].reshape(1, 10), (1, 128)).astype(f32)

    # --- conv1 + bias + maxpool2 + relu (fused kernel) ---
    x = x_nchw.reshape(N, 28, 28, 1).astype(bf16)       # NCHW (C=1) -> NHWC
    p1 = _pool_grouped_patches(x, 5)                    # (N, 4, 144, 25)
    p1 = _pad_last(p1, 32)                              # K 25 -> 32
    a1 = conv_pool_relu(p1, w1, b1)                     # (N, 144, 128) bf16

    # --- conv2 + bias + (dropout2d: identity) + maxpool2 + relu (fused kernel) ---
    a1 = a1.reshape(N, 12, 12, 128)[..., :10]           # valid channels only
    p2 = _pool_grouped_patches(a1, 5)                   # (N, 4, 16, 250)
    p2 = _pad_last(p2, 256)                             # K 250 -> 256
    a2 = conv_pool_relu(p2, w2, b2)                     # (N, 16, 128) bf16

    # --- fc1 + relu + (dropout: identity) + fc2 + log_softmax (fused kernel) ---
    xf = a2.reshape(N, 16 * 128)                        # metadata-only flatten
    out = fc_fused(xf, fw1, fb1, fw2, fb2, num_classes=10)   # (N, 128) f32
    return out[:, :10]


if __name__ == "__main__":
    key = jax.random.PRNGKey(0)
    pkey, xkey = jax.random.split(key)
    params = init_params(pkey)

    # fc1 expects 320 = 20*4*4 -> 28x28 input; small batch of 2.
    x = jax.random.normal(xkey, (2, 1, 28, 28), jnp.float32)

    out = simple_cnn_forward(params, x)
    out = jax.block_until_ready(out)

    assert out.shape == (2, 10), out.shape
    # log_softmax sanity: exp rows sum to 1.
    row_sums = jnp.exp(out).sum(axis=-1)
    assert jnp.allclose(row_sums, 1.0, atol=1e-3), row_sums
    print("KERNEL_OK")
</pallas_src>

<mosaic_0001>
module attributes {stable_mosaic.version = 11 : i64} {
  func.func @_conv_pool_relu_kernel(%arg0: i32, %arg1: memref<1x4x144x32xbf16, #tpu.memory_space<vmem>>, %arg2: memref<32x128xbf16, #tpu.memory_space<vmem>>, %arg3: memref<1x128xf32, #tpu.memory_space<vmem>>, %arg4: memref<1x144x128xbf16, #tpu.memory_space<vmem>>) attributes {dimension_semantics = [#tpu.dimension_semantics<parallel>], iteration_bounds = array<i64: 2>, scalar_prefetch = 0 : i64, scratch_operands = 0 : i64, tpu.core_type = #tpu.core_type<tc>, window_params = [{transform_indices = @transform_0, window_bounds = array<i64: 1, 4, 144, 32>}, {pipeline_mode = #tpu.pipeline_mode<synchronous>, transform_indices = @transform_1, window_bounds = array<i64: 32, 128>}, {pipeline_mode = #tpu.pipeline_mode<synchronous>, transform_indices = @transform_2, window_bounds = array<i64: 1, 128>}, {transform_indices = @transform_3, window_bounds = array<i64: 1, 144, 128>}]} {
    %c0 = arith.constant 0 : index
    %c0_0 = arith.constant 0 : index
    %0 = vector.load %arg2[%c0, %c0_0] : memref<32x128xbf16, #tpu.memory_space<vmem>>, vector<32x128xbf16>
    %c0_1 = arith.constant 0 : index
    %c0_2 = arith.constant 0 : index
    %c0_3 = arith.constant 0 : index
    %c0_4 = arith.constant 0 : index
    %1 = vector.load %arg1[%c0_1, %c0_2, %c0_3, %c0_4] : memref<1x4x144x32xbf16, #tpu.memory_space<vmem>>, vector<1x1x144x32xbf16>
    %2 = vector.shape_cast %1 : vector<1x1x144x32xbf16> to vector<144x32xbf16>
    %cst = arith.constant dense<0.000000e+00> : vector<144x128xf32>
    %3 = tpu.matmul %2, %0, %cst {dimension_numbers = #tpu.dot_dimension_numbers<[1], [0], [0], [1], [0, 0, 1, 1], [], []>} : vector<144x32xbf16>, vector<32x128xbf16>, vector<144x128xf32> -> vector<144x128xf32>
    %c0_5 = arith.constant 0 : index
    %c1 = arith.constant 1 : index
    %c0_6 = arith.constant 0 : index
    %c0_7 = arith.constant 0 : index
    %4 = vector.load %arg1[%c0_5, %c1, %c0_6, %c0_7] : memref<1x4x144x32xbf16, #tpu.memory_space<vmem>>, vector<1x1x144x32xbf16>
    %5 = vector.shape_cast %4 : vector<1x1x144x32xbf16> to vector<144x32xbf16>
    %cst_8 = arith.constant dense<0.000000e+00> : vector<144x128xf32>
    %6 = tpu.matmul %5, %0, %cst_8 {dimension_numbers = #tpu.dot_dimension_numbers<[1], [0], [0], [1], [0, 0, 1, 1], [], []>} : vector<144x32xbf16>, vector<32x128xbf16>, vector<144x128xf32> -> vector<144x128xf32>
    %c0_9 = arith.constant 0 : index
    %c2 = arith.constant 2 : index
    %c0_10 = arith.constant 0 : index
    %c0_11 = arith.constant 0 : index
    %7 = vector.load %arg1[%c0_9, %c2, %c0_10, %c0_11] : memref<1x4x144x32xbf16, #tpu.memory_space<vmem>>, vector<1x1x144x32xbf16>
    %8 = vector.shape_cast %7 : vector<1x1x144x32xbf16> to vector<144x32xbf16>
    %cst_12 = arith.constant dense<0.000000e+00> : vector<144x128xf32>
    %9 = tpu.matmul %8, %0, %cst_12 {dimension_numbers = #tpu.dot_dimension_numbers<[1], [0], [0], [1], [0, 0, 1, 1], [], []>} : vector<144x32xbf16>, vector<32x128xbf16>, vector<144x128xf32> -> vector<144x128xf32>
    %c0_13 = arith.constant 0 : index
    %c3 = arith.constant 3 : index
    %c0_14 = arith.constant 0 : index
    %c0_15 = arith.constant 0 : index
    %10 = vector.load %arg1[%c0_13, %c3, %c0_14, %c0_15] : memref<1x4x144x32xbf16, #tpu.memory_space<vmem>>, vector<1x1x144x32xbf16>
    %11 = vector.shape_cast %10 : vector<1x1x144x32xbf16> to vector<144x32xbf16>
    %cst_16 = arith.constant dense<0.000000e+00> : vector<144x128xf32>
    %12 = tpu.matmul %11, %0, %cst_16 {dimension_numbers = #tpu.dot_dimension_numbers<[1], [0], [0], [1], [0, 0, 1, 1], [], []>} : vector<144x32xbf16>, vector<32x128xbf16>, vector<144x128xf32> -> vector<144x128xf32>
    %13 = arith.maximumf %3, %6 : vector<144x128xf32>
    %14 = arith.maximumf %9, %12 : vector<144x128xf32>
    %15 = arith.maximumf %13, %14 : vector<144x128xf32>
    %c0_17 = arith.constant 0 : index
    %c0_18 = arith.constant 0 : index
    %16 = vector.load %arg3[%c0_17, %c0_18] : memref<1x128xf32, #tpu.memory_space<vmem>>, vector<1x128xf32>
    %17 = vector.broadcast %16 : vector<1x128xf32> to vector<144x128xf32>
    %18 = arith.addf %15, %17 : vector<144x128xf32>
    %cst_19 = arith.constant 0.000000e+00 : f32
    %19 = vector.broadcast %cst_19 : f32 to vector<144x128xf32>
    %20 = arith.maximumf %18, %19 : vector<144x128xf32>
    %21 = arith.truncf %20 : vector<144x128xf32> to vector<144x128xbf16>
    %c0_20 = arith.constant 0 : index
    %c0_21 = arith.constant 0 : index
    %c0_22 = arith.constant 0 : index
    %22 = vector.load %arg4[%c0_20, %c0_21, %c0_22] : memref<1x144x128xbf16, #tpu.memory_space<vmem>>, vector<1x144x128xbf16>
    %23 = vector.shape_cast %22 : vector<1x144x128xbf16> to vector<144x128xbf16>
    %24 = vector.shape_cast %21 : vector<144x128xbf16> to vector<1x144x128xbf16>
    tpu.vector_store %arg4[%c0_20, %c0_21, %c0_22], %24 {strides = array<i32>} : memref<1x144x128xbf16, #tpu.memory_space<vmem>>, vector<1x144x128xbf16>,
    return
  }
  func.func @transform_0(%arg0: i32) -> (i32, i32, i32, i32) {
    %c0_i32 = arith.constant 0 : i32
    %c0_i32_0 = arith.constant 0 : i32
    %c0_i32_1 = arith.constant 0 : i32
    %c0_i32_2 = arith.constant 0 : i32
    return %arg0, %c0_i32, %c0_i32_0, %c0_i32_1 : i32, i32, i32, i32
  }
  func.func @transform_1(%arg0: i32) -> (i32, i32) {
    %c0_i32 = arith.constant 0 : i32
    %c0_i32_0 = arith.constant 0 : i32
    %c0_i32_1 = arith.constant 0 : i32
    return %c0_i32, %c0_i32_0 : i32, i32
  }
  func.func @transform_2(%arg0: i32) -> (i32, i32) {
    %c0_i32 = arith.constant 0 : i32
    %c0_i32_0 = arith.constant 0 : i32
    %c0_i32_1 = arith.constant 0 : i32
    return %c0_i32, %c0_i32_0 : i32, i32
  }
  func.func @transform_3(%arg0: i32) -> (i32, i32, i32) {
    %c0_i32 = arith.constant 0 : i32
    %c0_i32_0 = arith.constant 0 : i32
    %c0_i32_1 = arith.constant 0 : i32
    return %arg0, %c0_i32, %c0_i32_0 : i32, i32, i32
  }
}

module attributes {stable_mosaic.version = 11 : i64} {
  func.func @_conv_pool_relu_kernel(%arg0: i32, %arg1: memref<1x4x16x256xbf16, #tpu.memory_space<vmem>>, %arg2: memref<256x128xbf16, #tpu.memory_space<vmem>>, %arg3: memref<1x128xf32, #tpu.memory_space<vmem>>, %arg4: memref<1x16x128xbf16, #tpu.memory_space<vmem>>) attributes {dimension_semantics = [#tpu.dimension_semantics<parallel>], iteration_bounds = array<i64: 2>, scalar_prefetch = 0 : i64, scratch_operands = 0 : i64, tpu.core_type = #tpu.core_type<tc>, window_params = [{transform_indices = @transform_0, window_bounds = array<i64: 1, 4, 16, 256>}, {pipeline_mode = #tpu.pipeline_mode<synchronous>, transform_indices = @transform_1, window_bounds = array<i64: 256, 128>}, {pipeline_mode = #tpu.pipeline_mode<synchronous>, transform_indices = @transform_2, window_bounds = array<i64: 1, 128>}, {transform_indices = @transform_3, window_bounds = array<i64: 1, 16, 128>}]} {
    %c0 = arith.constant 0 : index
    %c0_0 = arith.constant 0 : index
    %0 = vector.load %arg2[%c0, %c0_0] : memref<256x128xbf16, #tpu.memory_space<vmem>>, vector<256x128xbf16>
    %c0_1 = arith.constant 0 : index
    %c0_2 = arith.constant 0 : index
    %c0_3 = arith.constant 0 : index
    %c0_4 = arith.constant 0 : index
    %1 = vector.load %arg1[%c0_1, %c0_2, %c0_3, %c0_4] : memref<1x4x16x256xbf16, #tpu.memory_space<vmem>>, vector<1x1x16x256xbf16>
    %2 = vector.shape_cast %1 : vector<1x1x16x256xbf16> to vector<16x256xbf16>
    %cst = arith.constant dense<0.000000e+00> : vector<16x128xf32>
    %3 = tpu.matmul %2, %0, %cst {dimension_numbers = #tpu.dot_dimension_numbers<[1], [0], [0], [1], [0, 0, 1, 1], [], []>} : vector<16x256xbf16>, vector<256x128xbf16>, vector<16x128xf32> -> vector<16x128xf32>
    %c0_5 = arith.constant 0 : index
    %c1 = arith.constant 1 : index
    %c0_6 = arith.constant 0 : index
    %c0_7 = arith.constant 0 : index
    %4 = vector.load %arg1[%c0_5, %c1, %c0_6, %c0_7] : memref<1x4x16x256xbf16, #tpu.memory_space<vmem>>, vector<1x1x16x256xbf16>
    %5 = vector.shape_cast %4 : vector<1x1x16x256xbf16> to vector<16x256xbf16>
    %cst_8 = arith.constant dense<0.000000e+00> : vector<16x128xf32>
    %6 = tpu.matmul %5, %0, %cst_8 {dimension_numbers = #tpu.dot_dimension_numbers<[1], [0], [0], [1], [0, 0, 1, 1], [], []>} : vector<16x256xbf16>, vector<256x128xbf16>, vector<16x128xf32> -> vector<16x128xf32>
    %c0_9 = arith.constant 0 : index
    %c2 = arith.constant 2 : index
    %c0_10 = arith.constant 0 : index
    %c0_11 = arith.constant 0 : index
    %7 = vector.load %arg1[%c0_9, %c2, %c0_10, %c0_11] : memref<1x4x16x256xbf16, #tpu.memory_space<vmem>>, vector<1x1x16x256xbf16>
    %8 = vector.shape_cast %7 : vector<1x1x16x256xbf16> to vector<16x256xbf16>
    %cst_12 = arith.constant dense<0.000000e+00> : vector<16x128xf32>
    %9 = tpu.matmul %8, %0, %cst_12 {dimension_numbers = #tpu.dot_dimension_numbers<[1], [0], [0], [1], [0, 0, 1, 1], [], []>} : vector<16x256xbf16>, vector<256x128xbf16>, vector<16x128xf32> -> vector<16x128xf32>
    %c0_13 = arith.constant 0 : index
    %c3 = arith.constant 3 : index
    %c0_14 = arith.constant 0 : index
    %c0_15 = arith.constant 0 : index
    %10 = vector.load %arg1[%c0_13, %c3, %c0_14, %c0_15] : memref<1x4x16x256xbf16, #tpu.memory_space<vmem>>, vector<1x1x16x256xbf16>
    %11 = vector.shape_cast %10 : vector<1x1x16x256xbf16> to vector<16x256xbf16>
    %cst_16 = arith.constant dense<0.000000e+00> : vector<16x128xf32>
    %12 = tpu.matmul %11, %0, %cst_16 {dimension_numbers = #tpu.dot_dimension_numbers<[1], [0], [0], [1], [0, 0, 1, 1], [], []>} : vector<16x256xbf16>, vector<256x128xbf16>, vector<16x128xf32> -> vector<16x128xf32>
    %13 = arith.maximumf %3, %6 : vector<16x128xf32>
    %14 = arith.maximumf %9, %12 : vector<16x128xf32>
    %15 = arith.maximumf %13, %14 : vector<16x128xf32>
    %c0_17 = arith.constant 0 : index
    %c0_18 = arith.constant 0 : index
    %16 = vector.load %arg3[%c0_17, %c0_18] : memref<1x128xf32, #tpu.memory_space<vmem>>, vector<1x128xf32>
    %17 = vector.broadcast %16 : vector<1x128xf32> to vector<16x128xf32>
    %18 = arith.addf %15, %17 : vector<16x128xf32>
    %cst_19 = arith.constant 0.000000e+00 : f32
    %19 = vector.broadcast %cst_19 : f32 to vector<16x128xf32>
    %20 = arith.maximumf %18, %19 : vector<16x128xf32>
    %21 = arith.truncf %20 : vector<16x128xf32> to vector<16x128xbf16>
    %c0_20 = arith.constant 0 : index
    %c0_21 = arith.constant 0 : index
    %c0_22 = arith.constant 0 : index
    %22 = vector.load %arg4[%c0_20, %c0_21, %c0_22] : memref<1x16x128xbf16, #tpu.memory_space<vmem>>, vector<1x16x128xbf16>
    %23 = vector.shape_cast %22 : vector<1x16x128xbf16> to vector<16x128xbf16>
    %24 = vector.shape_cast %21 : vector<16x128xbf16> to vector<1x16x128xbf16>
    tpu.vector_store %arg4[%c0_20, %c0_21, %c0_22], %24 {strides = array<i32>} : memref<1x16x128xbf16, #tpu.memory_space<vmem>>, vector<1x16x128xbf16>,
    return
  }
  func.func @transform_0(%arg0: i32) -> (i32, i32, i32, i32) {
    %c0_i32 = arith.constant 0 : i32
    %c0_i32_0 = arith.constant 0 : i32
    %c0_i32_1 = arith.constant 0 : i32
    %c0_i32_2 = arith.constant 0 : i32
    return %arg0, %c0_i32, %c0_i32_0, %c0_i32_1 : i32, i32, i32, i32
  }
  func.func @transform_1(%arg0: i32) -> (i32, i32) {
    %c0_i32 = arith.constant 0 : i32
    %c0_i32_0 = arith.constant 0 : i32
    %c0_i32_1 = arith.constant 0 : i32
    return %c0_i32, %c0_i32_0 : i32, i32
  }
  func.func @transform_2(%arg0: i32) -> (i32, i32) {
    %c0_i32 = arith.constant 0 : i32
    %c0_i32_0 = arith.constant 0 : i32
    %c0_i32_1 = arith.constant 0 : i32
    return %c0_i32, %c0_i32_0 : i32, i32
  }
  func.func @transform_3(%arg0: i32) -> (i32, i32, i32) {
    %c0_i32 = arith.constant 0 : i32
    %c0_i32_0 = arith.constant 0 : i32
    %c0_i32_1 = arith.constant 0 : i32
    return %arg0, %c0_i32, %c0_i32_0 : i32, i32, i32
  }
}

module attributes {stable_mosaic.version = 11 : i64} {
  func.func @_fc_fused_kernel(%arg0: memref<2x2048xbf16, #tpu.memory_space<vmem>>, %arg1: memref<2048x128xbf16, #tpu.memory_space<vmem>>, %arg2: memref<1x128xf32, #tpu.memory_space<vmem>>, %arg3: memref<128x128xbf16, #tpu.memory_space<vmem>>, %arg4: memref<1x128xf32, #tpu.memory_space<vmem>>, %arg5: memref<2x128xf32, #tpu.memory_space<vmem>>) attributes {dimension_semantics = [], scalar_prefetch = 0 : i64, scratch_operands = 0 : i64, tpu.core_type = #tpu.core_type<tc>} {
    %c0 = arith.constant 0 : index
    %c0_0 = arith.constant 0 : index
    %0 = vector.load %arg0[%c0, %c0_0] : memref<2x2048xbf16, #tpu.memory_space<vmem>>, vector<2x2048xbf16>
    %c0_1 = arith.constant 0 : index
    %c0_2 = arith.constant 0 : index
    %1 = vector.load %arg1[%c0_1, %c0_2] : memref<2048x128xbf16, #tpu.memory_space<vmem>>, vector<2048x128xbf16>
    %cst = arith.constant dense<0.000000e+00> : vector<2x128xf32>
    %2 = tpu.matmul %0, %1, %cst {dimension_numbers = #tpu.dot_dimension_numbers<[1], [0], [0], [1], [0, 0, 1, 1], [], []>} : vector<2x2048xbf16>, vector<2048x128xbf16>, vector<2x128xf32> -> vector<2x128xf32>
    %c0_3 = arith.constant 0 : index
    %c0_4 = arith.constant 0 : index
    %3 = vector.load %arg2[%c0_3, %c0_4] : memref<1x128xf32, #tpu.memory_space<vmem>>, vector<1x128xf32>
    %4 = vector.broadcast %3 : vector<1x128xf32> to vector<2x128xf32>
    %5 = arith.addf %2, %4 : vector<2x128xf32>
    %cst_5 = arith.constant 0.000000e+00 : f32
    %6 = vector.broadcast %cst_5 : f32 to vector<2x128xf32>
    %7 = arith.maximumf %5, %6 : vector<2x128xf32>
    %8 = arith.truncf %7 : vector<2x128xf32> to vector<2x128xbf16>
    %c0_6 = arith.constant 0 : index
    %c0_7 = arith.constant 0 : index
    %9 = vector.load %arg3[%c0_6, %c0_7] : memref<128x128xbf16, #tpu.memory_space<vmem>>, vector<128x128xbf16>
    %cst_8 = arith.constant dense<0.000000e+00> : vector<2x128xf32>
    %10 = tpu.matmul %8, %9, %cst_8 {dimension_numbers = #tpu.dot_dimension_numbers<[1], [0], [0], [1], [0, 0, 1, 1], [], []>} : vector<2x128xbf16>, vector<128x128xbf16>, vector<2x128xf32> -> vector<2x128xf32>
    %c0_9 = arith.constant 0 : index
    %c0_10 = arith.constant 0 : index
    %11 = vector.load %arg4[%c0_9, %c0_10] : memref<1x128xf32, #tpu.memory_space<vmem>>, vector<1x128xf32>
    %12 = vector.broadcast %11 : vector<1x128xf32> to vector<2x128xf32>
    %13 = arith.addf %10, %12 : vector<2x128xf32>
    %14 = tpu.iota {dimensions = array<i32: 1>} : vector<2x128xi32>
    %c10_i32 = arith.constant 10 : i32
    %15 = vector.broadcast %c10_i32 : i32 to vector<2x128xi32>
    %16 = arith.cmpi slt, %14, %15 : vector<2x128xi32>
    %cst_11 = arith.constant -1.000000e+30 : f32
    %17 = vector.broadcast %cst_11 : f32 to vector<2x128xf32>
    %18 = arith.select %16, %13, %17 : vector<2x128xi1>, vector<2x128xf32>
    %cst_12 = arith.constant dense<0xFF800000> : vector<2xf32>
    %19 = vector.multi_reduction <maximumf>, %18, %cst_12 [1] : vector<2x128xf32> to vector<2xf32>
    %20 = vector.shape_cast %19 : vector<2xf32> to vector<2x1xf32>
    %21 = vector.broadcast %20 : vector<2x1xf32> to vector<2x128xf32>
    %22 = arith.subf %18, %21 : vector<2x128xf32>
    %23 = math.exp %22 : vector<2x128xf32>
    %cst_13 = arith.constant dense<0.000000e+00> : vector<2xf32>
    %24 = vector.multi_reduction <add>, %23, %cst_13 [1] : vector<2x128xf32> to vector<2xf32>
    %25 = vector.shape_cast %24 : vector<2xf32> to vector<2x1xf32>
    %26 = math.log %25 : vector<2x1xf32>
    %27 = vector.broadcast %26 : vector<2x1xf32> to vector<2x128xf32>
    %28 = arith.subf %22, %27 : vector<2x128xf32>
    %c0_14 = arith.constant 0 : index
    %c0_15 = arith.constant 0 : index
    %29 = vector.load %arg5[%c0_14, %c0_15] : memref<2x128xf32, #tpu.memory_space<vmem>>, vector<2x128xf32>
    tpu.vector_store %arg5[%c0_14, %c0_15], %28 {strides = array<i32>} : memref<2x128xf32, #tpu.memory_space<vmem>>, vector<2x128xf32>,
    return
  }
}

</mosaic_0001>

<llo_original>
// kernel: simple_cnn_forward.3
$region0: #{simple_cnn_forward.3}
  #allocation0 [shape = 'u32[]', space=smem, size = 0x4, offset = 0x4, fixed_abs, tag = 'smem constant byte address 0x4 - core index']
  #allocation1 [shape = 'u32[144,128]{1,0:T(1,128)}', space=vmem, size = 0x12000, scoped, tag = 'internal scratch']
  %s0 = inlined_call_operand.vmem [shape: bf16[2,4,144,32], index: 0, kind: input, shape index: {}]
  %s1 = inlined_call_operand.vmem [shape: bf16[32,128], index: 1, kind: input, shape index: {}]
  %s2 = inlined_call_operand.vmem [shape: f32[1,128], index: 2, kind: input, shape index: {}]
  %s3 = inlined_call_operand.vmem [shape: bf16[2,144,128], index: 3, kind: output, shape index: {}]
  %s4 = sld [smem:[#allocation0]]
  $region45: #{simple_cnn_forward.3} parent=0
    _
  %s6 = ssub.s32 1, %s4
  %s7 = scalar_select 0, %s6, %s4
  loop: start=0, step=1, limit=4
  $region2: #{simple_cnn_forward.3} parent=0 // loop_pre_header
    _
  $region3: #{simple_cnn_forward.3} parent=0 // loop_header
    %s9 = sphi 0, %s13
    %p10 = scmp.ge.s32.totalorder %s9, 4
    %s19 = sphi 0, %s21
    %s22 = sphi 0, %s19
    %s23 = sphi 0, %s22
    %s39 = sphi 0, %s23
    %s43 = sphi 0, %s43
    %s45 = sphi 0, %s43
    %s46 = sphi 0, %s45
    %s60 = sphi 0, %s46
    %s64 = sphi 0, %s64
    %s66 = sphi 0, %s64
    %s67 = sphi 0, %s66
    %s81 = sphi 0, %s67
    %s87 = sphi 0, %s89
    %s90 = sphi 0, %s87
    %s91 = sphi 0, %s90
    %s107 = sphi 0, %s91
  $region4: #{simple_cnn_forward.3} parent=0 // loop_header_branch
    %12 = sbr.rel (%p10) target = $region8
  $region5: #{simple_cnn_forward.3} parent=0 // loop_body
    %s14 = ssub.s32 %s9, 1
    %s15 = ssub.s32 %s9, 2
    %s16 = sadd.s32 %s9, 1
    %s17 = ssub.s32 %s9, %s16
    %p18 = scmp.eq.s32.totalorder %s17, 0
    %s20 = sadd.s32 %s19, 1
    %s21 = scalar_select %p18, %s19, %s20
    %p24 = pneg %p18
    %p25 = scmp.eq.s32.totalorder %s9, 1
    %p26 = por %p24, %p25
    %p27 = scmp.ne.s32.totalorder %s19, %s22
    %p28 = scmp.eq.s32.totalorder %s9, 0
    %p29 = por %p27, %p28
    %p30 = scmp.ne.s32.totalorder %s19, %s22
    %p31 = scmp.eq.s32.totalorder %s14, 1
    %p32 = por %p30, %p31
    %p33 = scmp.ne.s32.totalorder %s22, %s23
    %p34 = scmp.eq.s32.totalorder %s14, 0
    %p35 = por %p33, %p34
    %p36 = scmp.ne.s32.totalorder %s22, %s23
    %p37 = scmp.eq.s32.totalorder %s15, 1
    %p38 = por %p36, %p37
    %p40 = scmp.ne.s32.totalorder %s23, %s39
    %p41 = scmp.eq.s32.totalorder %s15, 0
    %p42 = por %p40, %p41
    %s44 = sadd.s32 %s43, 1
    %p47 = scmp.eq.s32.totalorder %s9, 1
    %p48 = scmp.ne.s32.totalorder %s43, %s45
    %p49 = scmp.eq.s32.totalorder %s9, 0
    %p50 = por %p48, %p49
    %p51 = scmp.ne.s32.totalorder %s43, %s45
    %p52 = scmp.eq.s32.totalorder %s14, 1
    %p53 = por %p51, %p52
    %p54 = scmp.ne.s32.totalorder %s45, %s46
    %p55 = scmp.eq.s32.totalorder %s14, 0
    %p56 = por %p54, %p55
    %p57 = scmp.ne.s32.totalorder %s45, %s46
    %p58 = scmp.eq.s32.totalorder %s15, 1
    %p59 = por %p57, %p58
    %p61 = scmp.ne.s32.totalorder %s46, %s60
    %p62 = scmp.eq.s32.totalorder %s15, 0
    %p63 = por %p61, %p62
    %s65 = sadd.s32 %s64, 1
    %p68 = scmp.eq.s32.totalorder %s9, 1
    %p69 = scmp.ne.s32.totalorder %s64, %s66
    %p70 = scmp.eq.s32.totalorder %s9, 0
    %p71 = por %p69, %p70
    %p72 = scmp.ne.s32.totalorder %s64, %s66
    %p73 = scmp.eq.s32.totalorder %s14, 1
    %p74 = por %p72, %p73
    %p75 = scmp.ne.s32.totalorder %s66, %s67
    %p76 = scmp.eq.s32.totalorder %s14, 0
    %p77 = por %p75, %p76
    %p78 = scmp.ne.s32.totalorder %s66, %s67
    %p79 = scmp.eq.s32.totalorder %s15, 1
    %p80 = por %p78, %p79
    %p82 = scmp.ne.s32.totalorder %s67, %s81
    %p83 = scmp.eq.s32.totalorder %s15, 0
    %p84 = por %p82, %p83
    %s85 = ssub.s32 %s9, %s16
    %p86 = scmp.eq.s32.totalorder %s85, 0
    %s88 = sadd.s32 %s87, 1
    %s89 = scalar_select %p86, %s87, %s88
    %p92 = pneg %p86
    %p93 = scmp.eq.s32.totalorder %s9, 1
    %p94 = por %p92, %p93
    %p95 = scmp.ne.s32.totalorder %s87, %s90
    %p96 = scmp.eq.s32.totalorder %s9, 0
    %p97 = por %p95, %p96
    %p98 = scmp.ne.s32.totalorder %s87, %s90
    %p99 = scmp.eq.s32.totalorder %s14, 1
    %p100 = por %p98, %p99
    %p101 = scmp.ne.s32.totalorder %s90, %s91
    %p102 = scmp.eq.s32.totalorder %s14, 0
    %p103 = por %p101, %p102
    %p104 = scmp.ne.s32.totalorder %s90, %s91
    %p105 = scmp.eq.s32.totalorder %s15, 1
    %p106 = por %p104, %p105
    %p108 = scmp.ne.s32.totalorder %s91, %s107
    %p109 = scmp.eq.s32.totalorder %s15, 0
    %p110 = por %p108, %p109
    %p111 = scmp.le.s32.totalorder 1, %s9
    %p112 = scmp.lt.s32.totalorder %s9, 3
    %p113 = pnand %p111, %p112
    %p114 = pneg %p113
    // Predicated region
    $region9: #{simple_cnn_forward.3} parent=5 // pred_check
      _
    $region10: #{simple_cnn_forward.3} parent=5 // pred_check_branch
      %116 = sbr.rel (%p113) target = $region12
    $region11: #{simple_cnn_forward.3} parent=5 // pred_region
      %s117 = ssub.s32 %s9, 1
      // Predicated region
      $region13: #{simple_cnn_forward.3} parent=11 // pred_check
        %p118 = pneg %p56
      $region14: #{simple_cnn_forward.3} parent=11 // pred_check_branch
        %120 = sbr.rel (%p118) target = $region16
      $region15: #{simple_cnn_forward.3} parent=11 // pred_region
        _
      $region16: #{simple_cnn_forward.3} parent=11 // pred_fallthru
        _
      // Predicated region
      $region17: #{simple_cnn_forward.3} parent=11 // pred_check
        %p121 = pneg %p77
      $region18: #{simple_cnn_forward.3} parent=11 // pred_check_branch
        %123 = sbr.rel (%p121) target = $region20
      $region19: #{simple_cnn_forward.3} parent=11 // pred_region
        _
      $region20: #{simple_cnn_forward.3} parent=11 // pred_fallthru
        _
    $region12: #{simple_cnn_forward.3} parent=5 // pred_fallthru
      _
    %p124 = scmp.lt.s32.totalorder %s9, 2
    // Predicated region
    $region21: #{simple_cnn_forward.3} parent=5 // pred_check
      %p125 = pneg %p124
    $region22: #{simple_cnn_forward.3} parent=5 // pred_check_branch
      %127 = sbr.rel (%p125) target = $region24
    $region23: #{simple_cnn_forward.3} parent=5 // pred_region
      // Predicated region
      $region25: #{simple_cnn_forward.3} parent=23 // pred_check
        %p128 = pneg %p29
      $region26: #{simple_cnn_forward.3} parent=23 // pred_check_branch
        %130 = sbr.rel (%p128) target = $region28
      $region27: #{simple_cnn_forward.3} parent=23 // pred_region
        %p131 = scmp.lt.s32.totalorder %s9, 1
        %s132 = scalar_select %p131, %s9, 1
        %s133 = smul.addr %s132, 72
        %s134 = smul.addr %s133, 4
        %s135 = scalar_lea.vmem %s0, %s134
      $region28: #{simple_cnn_forward.3} parent=23 // pred_fallthru
        _
    $region24: #{simple_cnn_forward.3} parent=5 // pred_fallthru
      _
    %p136 = scmp.le.s32.totalorder 1, %s9
    %p137 = scmp.lt.s32.totalorder %s9, 3
    %p138 = pnand %p136, %p137
    %p139 = pneg %p138
    // Predicated region
    $region29: #{simple_cnn_forward.3} parent=5 // pred_check
      _
    $region30: #{simple_cnn_forward.3} parent=5 // pred_check_branch
      %141 = sbr.rel (%p138) target = $region32
    $region31: #{simple_cnn_forward.3} parent=5 // pred_region
      %s142 = ssub.s32 %s9, 1
      %p143 = scmp.lt.s32.totalorder %s14, 1
      %s144 = scalar_select %p143, %s14, 1
      %s145 = smul.addr %s144, 72
      %s146 = smul.addr %s145, 4
      %s147 = scalar_lea.vmem %s0, %s146
      %p148 = pneg %p35
      %p149 = pneg %p32
      %p150 = pneg %p56
      %p151 = pneg %p53
      %p152 = pneg %p77
      %p153 = pneg %p74
      %p154 = pneg %p103
      %p155 = pneg %p100
      %p156 = scmp.lt.s32.totalorder %s14, 1
      %s157 = scalar_select %p156, %s14, 1
      %s158 = smul.addr %s157, 18
      %s159 = smul.addr %s158, 4
      %s160 = scalar_lea.vmem %s3, %s159
      %p161 = scmp.lt.s32.totalorder %s14, 1
      %s162 = scalar_select %p161, %s14, 1
      %s163 = smul.addr %s162, 72
      %s164 = smul.addr %s163, 4
      %s165 = scalar_lea.vmem %s0, %s164
      %p166 = scmp.lt.s32.totalorder %s14, 1
      %s167 = scalar_select %p166, %s14, 1
      %s168 = smul.addr %s167, 18
      %s169 = smul.addr %s168, 4
      %s170 = scalar_lea.vmem %s3, %s169
      %v172 = vld [vmem:[%s1] sm:$0xf]
      %v173 = vld [vmem:[%s1 + $0x4] sm:$0xf]
      %v174 = vld [vmem:[%s1 + $0x8] sm:$0xf]
      %v175 = vld [vmem:[%s1 + $0xc] sm:$0xf]
      %v176 = vld [vmem:[%s165] sm:$0xf]
      %v177 = vld [vmem:[%s165 + $0x4] sm:$0xf]
      %v178 = vld [vmem:[%s165 + $0x8] sm:$0xf]
      %v179 = vld [vmem:[%s165 + $0xc] sm:$0xf]
      %v180 = vld [vmem:[%s165 + $0x10] sm:$0xf]
      %v181 = vld [vmem:[%s165 + $0x14] sm:$0xf]
      %v182 = vld [vmem:[%s165 + $0x18] sm:$0xf]
      %v183 = vld [vmem:[%s165 + $0x1c] sm:$0xf]
      %v184 = vld [vmem:[%s165 + $0x20] sm:$0xf]
      %v185 = vld [vmem:[%s165 + $0x24] sm:$0xf]
      %v186 = vld [vmem:[%s165 + $0x28] sm:$0xf]
      %v187 = vld [vmem:[%s165 + $0x2c] sm:$0xf]
      %v188 = vld [vmem:[%s165 + $0x30] sm:$0xf]
      %v189 = vld [vmem:[%s165 + $0x34] sm:$0xf]
      %v190 = vld [vmem:[%s165 + $0x38] sm:$0xf]
      %v191 = vld [vmem:[%s165 + $0x3c] sm:$0xf]
      %v192 = vld [vmem:[%s165 + $0x40] sm:$0xf]
      %v193 = vld [vmem:[%s165 + $0x44] sm:$0xf]
      %v212 = vunpack.c.l.b16 %v176
      %v213 = vunpack.c.l.b16 %v177
      %v214 = vunpack.c.l.b16 %v178
      %v215 = vunpack.c.l.b16 %v179
      %v216 = vunpack.c.l.b16 %v180
      %v217 = vunpack.c.l.b16 %v181
      %v218 = vunpack.c.l.b16 %v182
      %v219 = vunpack.c.l.b16 %v183
      %v220 = vunpack.c.l.b16 %v184
      %v221 = vunpack.c.l.b16 %v185
      %v222 = vunpack.c.l.b16 %v186
      %v223 = vunpack.c.l.b16 %v187
      %v224 = vunpack.c.l.b16 %v188
      %v225 = vunpack.c.l.b16 %v189
      %v226 = vunpack.c.l.b16 %v190
      %v227 = vunpack.c.l.b16 %v191
      %v228 = vunpack.c.l.b16 %v192
      %v229 = vunpack.c.l.b16 %v193
      %v230 = vpack.c.b16 %v213, %v212
      %v231 = vpack.c.b16 %v215, %v214
      %v232 = vpack.c.b16 %v217, %v216
      %v233 = vpack.c.b16 %v219, %v218
      %v234 = vpack.c.b16 %v221, %v220
      %v235 = vpack.c.b16 %v223, %v222
      %v236 = vpack.c.b16 %v225, %v224
      %v237 = vpack.c.b16 %v227, %v226
      %v238 = vpack.c.b16 %v229, %v228
      %v243 = vunpack.c.l.b16 %v172
      %v244 = vunpack.c.l.b16 %v173
      %v245 = vunpack.c.l.b16 %v174
      %v246 = vunpack.c.l.b16 %v175
      %v247 = vpack.c.b16 %v244, %v243
      %v248 = vpack.c.b16 %v246, %v245
      %vm251 = vcmask 261120
      %v253 = vsel %vm251, %v230, 0
      %v256 = vsel %vm251, %v231, 0
      %v259 = vsel %vm251, %v232, 0
      %v262 = vsel %vm251, %v233, 0
      %v265 = vsel %vm251, %v234, 0
      %v268 = vsel %vm251, %v235, 0
      %v271 = vsel %vm251, %v236, 0
      %v274 = vsel %vm251, %v237, 0
      %v277 = vsel %vm251, %v238, 0
      %279 = vmatprep.subr.bf16.mxu0 0
      %280 = vmatpush1.bf16.msra.mxu0 0
      %281 = vmatprep.subr.bf16.mxu0 0
      %282 = vmatpush1.bf16.msra.mxu0 0
      %283 = vmatprep.subr.bf16.mxu0 0
      %284 = vmatpush1.bf16.msra.mxu0 0
      %285 = vmatprep.subr.bf16.mxu0 0
      %286 = vmatpush1.bf16.msra.mxu0 0
      %287 = vmatprep.subr.bf16.mxu0 0
      %288 = vmatpush1.bf16.msra.mxu0 0
      %289 = vmatprep.subr.bf16.mxu0 0
      %290 = vmatpush1.bf16.msra.mxu0 0
      %291 = vmatprep.subr.bf16.mxu0 0
      %292 = vmatpush1.bf16.msra.mxu0 %v248
      %293 = vmatprep.subr.bf16.mxu0 0
      %294 = vmatpush1.bf16.msra.mxu0 %v247
      %295 = vmatprep.subr.bf16.mxu0 0
      %296 = vmatpush2.bf16.msra.mxu0 0
      %297 = vmatprep.subr.bf16.mxu0 0
      %298 = vmatpush2.bf16.msra.mxu0 0
      %299 = vmatprep.subr.bf16.mxu0 0
      %300 = vmatpush2.bf16.msra.mxu0 0
      %301 = vmatprep.subr.bf16.mxu0 0
      %302 = vmatpush2.bf16.msra.mxu0 0
      %303 = vmatprep.subr.bf16.mxu0 0
      %304 = vmatpush2.bf16.msra.mxu0 0
      %305 = vmatprep.subr.bf16.mxu0 0
      %306 = vmatpush2.bf16.msra.mxu0 0
      %307 = vmatprep.subr.bf16.mxu0 0
      %308 = vmatpush2.bf16.msra.mxu0 0
      %309 = vmatprep.subr.bf16.mxu0 0
      %310 = vmatpush2.bf16.msra.mxu0 0
      %311 = vmatprep.mubr.bf16.mxu0 0
      %312 = vmatmul.mubr.bf16.gmra.mxu0 %v253
      %v313 = vpop.f32.mrf.mxu0
      %v314 = vadd.f32 0.0, %v313
      %v315 = vpop.f32.mrf.mxu0
      %v316 = vpop.f32.mrf.mxu0
      %v317 = vadd.f32 0.0, %v316
      %v318 = vpop.f32.mrf.mxu0
      %319 = vmatprep.mubr.bf16.mxu0 0
      %320 = vmatmul.mubr.bf16.gmra.mxu0 %v256
      %v321 = vpop.f32.mrf.mxu0
      %v322 = vadd.f32 0.0, %v321
      %v323 = vpop.f32.mrf.mxu0
      %v324 = vpop.f32.mrf.mxu0
      %v325 = vadd.f32 0.0, %v324
      %v326 = vpop.f32.mrf.mxu0
      %327 = vmatprep.mubr.bf16.mxu0 0
      %328 = vmatmul.mubr.bf16.gmra.mxu0 %v259
      %v329 = vpop.f32.mrf.mxu0
      %v330 = vadd.f32 0.0, %v329
      %v331 = vpop.f32.mrf.mxu0
      %v332 = vpop.f32.mrf.mxu0
      %v333 = vadd.f32 0.0, %v332
      %v334 = vpop.f32.mrf.mxu0
      %335 = vmatprep.mubr.bf16.mxu0 0
      %336 = vmatmul.mubr.bf16.gmra.mxu0 %v262
      %v337 = vpop.f32.mrf.mxu0
      %v338 = vadd.f32 0.0, %v337
      %v339 = vpop.f32.mrf.mxu0
      %v340 = vpop.f32.mrf.mxu0
      %v341 = vadd.f32 0.0, %v340
      %v342 = vpop.f32.mrf.mxu0
      %343 = vmatprep.mubr.bf16.mxu0 0
      %344 = vmatmul.mubr.bf16.gmra.mxu0 %v265
      %v345 = vpop.f32.mrf.mxu0
      %v346 = vadd.f32 0.0, %v345
      %v347 = vpop.f32.mrf.mxu0
      %v348 = vpop.f32.mrf.mxu0
      %v349 = vadd.f32 0.0, %v348
      %v350 = vpop.f32.mrf.mxu0
      %351 = vmatprep.mubr.bf16.mxu0 0
      %352 = vmatmul.mubr.bf16.gmra.mxu0 %v268
      %v353 = vpop.f32.mrf.mxu0
      %v354 = vadd.f32 0.0, %v353
      %v355 = vpop.f32.mrf.mxu0
      %v356 = vpop.f32.mrf.mxu0
      %v357 = vadd.f32 0.0, %v356
      %v358 = vpop.f32.mrf.mxu0
      %359 = vmatprep.mubr.bf16.mxu0 0
      %360 = vmatmul.mubr.bf16.gmra.mxu0 %v271
      %v361 = vpop.f32.mrf.mxu0
      %v362 = vadd.f32 0.0, %v361
      %v363 = vpop.f32.mrf.mxu0
      %v364 = vpop.f32.mrf.mxu0
      %v365 = vadd.f32 0.0, %v364
      %v366 = vpop.f32.mrf.mxu0
      %367 = vmatprep.mubr.bf16.mxu0 0
      %368 = vmatmul.mubr.bf16.gmra.mxu0 %v274
      %v369 = vpop.f32.mrf.mxu0
      %v370 = vadd.f32 0.0, %v369
      %v371 = vpop.f32.mrf.mxu0
      %v372 = vpop.f32.mrf.mxu0
      %v373 = vadd.f32 0.0, %v372
      %v374 = vpop.f32.mrf.mxu0
      %375 = vmatprep.mubr.bf16.mxu0 0
      %376 = vmatmul.mubr.bf16.gmra.mxu0 %v277
      %v377 = vpop.f32.mrf.mxu0
      %v378 = vadd.f32 0.0, %v377
      %v379 = vpop.f32.mrf.mxu0
      %v380 = vpop.f32.mrf.mxu0
      %v381 = vadd.f32 0.0, %v380
      %v382 = vpop.f32.mrf.mxu0
      %383 = vdwg.mxu0
      %s384 = scalar_lea.vmem %s165, 72
      %v385 = vld [vmem:[%s384] sm:$0xf]
      %v386 = vld [vmem:[%s384 + $0x4] sm:$0xf]
      %v387 = vld [vmem:[%s384 + $0x8] sm:$0xf]
      %v388 = vld [vmem:[%s384 + $0xc] sm:$0xf]
      %v389 = vld [vmem:[%s384 + $0x10] sm:$0xf]
      %v390 = vld [vmem:[%s384 + $0x14] sm:$0xf]
      %v391 = vld [vmem:[%s384 + $0x18] sm:$0xf]
      %v392 = vld [vmem:[%s384 + $0x1c] sm:$0xf]
      %v393 = vld [vmem:[%s384 + $0x20] sm:$0xf]
      %v394 = vld [vmem:[%s384 + $0x24] sm:$0xf]
      %v395 = vld [vmem:[%s384 + $0x28] sm:$0xf]
      %v396 = vld [vmem:[%s384 + $0x2c] sm:$0xf]
      %v397 = vld [vmem:[%s384 + $0x30] sm:$0xf]
      %v398 = vld [vmem:[%s384 + $0x34] sm:$0xf]
      %v399 = vld [vmem:[%s384 + $0x38] sm:$0xf]
      %v400 = vld [vmem:[%s384 + $0x3c] sm:$0xf]
      %v401 = vld [vmem:[%s384 + $0x40] sm:$0xf]
      %v402 = vld [vmem:[%s384 + $0x44] sm:$0xf]
      %v421 = vunpack.c.l.b16 %v385
      %v422 = vunpack.c.l.b16 %v386
      %v423 = vunpack.c.l.b16 %v387
      %v424 = vunpack.c.l.b16 %v388
      %v425 = vunpack.c.l.b16 %v389
      %v426 = vunpack.c.l.b16 %v390
      %v427 = vunpack.c.l.b16 %v391
      %v428 = vunpack.c.l.b16 %v392
      %v429 = vunpack.c.l.b16 %v393
      %v430 = vunpack.c.l.b16 %v394
      %v431 = vunpack.c.l.b16 %v395
      %v432 = vunpack.c.l.b16 %v396
      %v433 = vunpack.c.l.b16 %v397
      %v434 = vunpack.c.l.b16 %v398
      %v435 = vunpack.c.l.b16 %v399
      %v436 = vunpack.c.l.b16 %v400
      %v437 = vunpack.c.l.b16 %v401
      %v438 = vunpack.c.l.b16 %v402
      %v439 = vpack.c.b16 %v422, %v421
      %v440 = vpack.c.b16 %v424, %v423
      %v441 = vpack.c.b16 %v426, %v425
      %v442 = vpack.c.b16 %v428, %v427
      %v443 = vpack.c.b16 %v430, %v429
      %v444 = vpack.c.b16 %v432, %v431
      %v445 = vpack.c.b16 %v434, %v433
      %v446 = vpack.c.b16 %v436, %v435
      %v447 = vpack.c.b16 %v438, %v437
      %v449 = vsel %vm251, %v439, 0
      %v452 = vsel %vm251, %v440, 0
      %v455 = vsel %vm251, %v441, 0
      %v458 = vsel %vm251, %v442, 0
      %v461 = vsel %vm251, %v443, 0
      %v464 = vsel %vm251, %v444, 0
      %v467 = vsel %vm251, %v445, 0
      %v470 = vsel %vm251, %v446, 0
      %v473 = vsel %vm251, %v447, 0
      %475 = vmatprep.subr.bf16.mxu0 0
      %476 = vmatpush1.bf16.msra.mxu0 0
      %477 = vmatprep.subr.bf16.mxu0 0
      %478 = vmatpush1.bf16.msra.mxu0 0
      %479 = vmatprep.subr.bf16.mxu0 0
      %480 = vmatpush1.bf16.msra.mxu0 0
      %481 = vmatprep.subr.bf16.mxu0 0
      %482 = vmatpush1.bf16.msra.mxu0 0
      %483 = vmatprep.subr.bf16.mxu0 0
      %484 = vmatpush1.bf16.msra.mxu0 0
      %485 = vmatprep.subr.bf16.mxu0 0
      %486 = vmatpush1.bf16.msra.mxu0 0
      %487 = vmatprep.subr.bf16.mxu0 0
      %488 = vmatpush1.bf16.msra.mxu0 %v248
      %489 = vmatprep.subr.bf16.mxu0 0
      %490 = vmatpush1.bf16.msra.mxu0 %v247
      %491 = vmatprep.subr.bf16.mxu0 0
      %492 = vmatpush2.bf16.msra.mxu0 0
      %493 = vmatprep.subr.bf16.mxu0 0
      %494 = vmatpush2.bf16.msra.mxu0 0
      %495 = vmatprep.subr.bf16.mxu0 0
      %496 = vmatpush2.bf16.msra.mxu0 0
      %497 = vmatprep.subr.bf16.mxu0 0
      %498 = vmatpush2.bf16.msra.mxu0 0
      %499 = vmatprep.subr.bf16.mxu0 0
      %500 = vmatpush2.bf16.msra.mxu0 0
      %501 = vmatprep.subr.bf16.mxu0 0
      %502 = vmatpush2.bf16.msra.mxu0 0
      %503 = vmatprep.subr.bf16.mxu0 0
      %504 = vmatpush2.bf16.msra.mxu0 0
      %505 = vmatprep.subr.bf16.mxu0 0
      %506 = vmatpush2.bf16.msra.mxu0 0
      %507 = vmatprep.mubr.bf16.mxu0 0
      %508 = vmatmul.mubr.bf16.gmra.mxu0 %v449
      %v509 = vpop.f32.mrf.mxu0
      %v510 = vadd.f32 0.0, %v509
      %v511 = vpop.f32.mrf.mxu0
      %v512 = vpop.f32.mrf.mxu0
      %v513 = vadd.f32 0.0, %v512
      %v514 = vpop.f32.mrf.mxu0
      %515 = vmatprep.mubr.bf16.mxu0 0
      %516 = vmatmul.mubr.bf16.gmra.mxu0 %v452
      %v517 = vpop.f32.mrf.mxu0
      %v518 = vadd.f32 0.0, %v517
      %v519 = vpop.f32.mrf.mxu0
      %v520 = vpop.f32.mrf.mxu0
      %v521 = vadd.f32 0.0, %v520
      %v522 = vpop.f32.mrf.mxu0
      %523 = vmatprep.mubr.bf16.mxu0 0
      %524 = vmatmul.mubr.bf16.gmra.mxu0 %v455
      %v525 = vpop.f32.mrf.mxu0
      %v526 = vadd.f32 0.0, %v525
      %v527 = vpop.f32.mrf.mxu0
      %v528 = vpop.f32.mrf.mxu0
      %v529 = vadd.f32 0.0, %v528
      %v530 = vpop.f32.mrf.mxu0
      %531 = vmatprep.mubr.bf16.mxu0 0
      %532 = vmatmul.mubr.bf16.gmra.mxu0 %v458
      %v533 = vpop.f32.mrf.mxu0
      %v534 = vadd.f32 0.0, %v533
      %v535 = vpop.f32.mrf.mxu0
      %v536 = vpop.f32.mrf.mxu0
      %v537 = vadd.f32 0.0, %v536
      %v538 = vpop.f32.mrf.mxu0
      %539 = vmatprep.mubr.bf16.mxu0 0
      %540 = vmatmul.mubr.bf16.gmra.mxu0 %v461
      %v541 = vpop.f32.mrf.mxu0
      %v542 = vadd.f32 0.0, %v541
      %v543 = vpop.f32.mrf.mxu0
      %v544 = vpop.f32.mrf.mxu0
      %v545 = vadd.f32 0.0, %v544
      %v546 = vpop.f32.mrf.mxu0
      %547 = vmatprep.mubr.bf16.mxu0 0
      %548 = vmatmul.mubr.bf16.gmra.mxu0 %v464
      %v549 = vpop.f32.mrf.mxu0
      %v550 = vadd.f32 0.0, %v549
      %v551 = vpop.f32.mrf.mxu0
      %v552 = vpop.f32.mrf.mxu0
      %v553 = vadd.f32 0.0, %v552
      %v554 = vpop.f32.mrf.mxu0
      %555 = vmatprep.mubr.bf16.mxu0 0
      %556 = vmatmul.mubr.bf16.gmra.mxu0 %v467
      %v557 = vpop.f32.mrf.mxu0
      %v558 = vadd.f32 0.0, %v557
      %v559 = vpop.f32.mrf.mxu0
      %v560 = vpop.f32.mrf.mxu0
      %v561 = vadd.f32 0.0, %v560
      %v562 = vpop.f32.mrf.mxu0
      %563 = vmatprep.mubr.bf16.mxu0 0
      %564 = vmatmul.mubr.bf16.gmra.mxu0 %v470
      %v565 = vpop.f32.mrf.mxu0
      %v566 = vadd.f32 0.0, %v565
      %v567 = vpop.f32.mrf.mxu0
      %v568 = vpop.f32.mrf.mxu0
      %v569 = vadd.f32 0.0, %v568
      %v570 = vpop.f32.mrf.mxu0
      %571 = vmatprep.mubr.bf16.mxu0 0
      %572 = vmatmul.mubr.bf16.gmra.mxu0 %v473
      %v573 = vpop.f32.mrf.mxu0
      %v574 = vadd.f32 0.0, %v573
      %v575 = vpop.f32.mrf.mxu0
      %v576 = vpop.f32.mrf.mxu0
      %v577 = vadd.f32 0.0, %v576
      %v578 = vpop.f32.mrf.mxu0
      %579 = vdwg.mxu0
      %s580 = scalar_lea.vmem %s165, 144
      %v581 = vld [vmem:[%s580] sm:$0xf]
      %v582 = vld [vmem:[%s580 + $0x4] sm:$0xf]
      %v583 = vld [vmem:[%s580 + $0x8] sm:$0xf]
      %v584 = vld [vmem:[%s580 + $0xc] sm:$0xf]
      %v585 = vld [vmem:[%s580 + $0x10] sm:$0xf]
      %v586 = vld [vmem:[%s580 + $0x14] sm:$0xf]
      %v587 = vld [vmem:[%s580 + $0x18] sm:$0xf]
      %v588 = vld [vmem:[%s580 + $0x1c] sm:$0xf]
      %v589 = vld [vmem:[%s580 + $0x20] sm:$0xf]
      %v590 = vld [vmem:[%s580 + $0x24] sm:$0xf]
      %v591 = vld [vmem:[%s580 + $0x28] sm:$0xf]
      %v592 = vld [vmem:[%s580 + $0x2c] sm:$0xf]
      %v593 = vld [vmem:[%s580 + $0x30] sm:$0xf]
      %v594 = vld [vmem:[%s580 + $0x34] sm:$0xf]
      %v595 = vld [vmem:[%s580 + $0x38] sm:$0xf]
      %v596 = vld [vmem:[%s580 + $0x3c] sm:$0xf]
      %v597 = vld [vmem:[%s580 + $0x40] sm:$0xf]
      %v598 = vld [vmem:[%s580 + $0x44] sm:$0xf]
      %v617 = vunpack.c.l.b16 %v581
      %v618 = vunpack.c.l.b16 %v582
      %v619 = vunpack.c.l.b16 %v583
      %v620 = vunpack.c.l.b16 %v584
      %v621 = vunpack.c.l.b16 %v585
      %v622 = vunpack.c.l.b16 %v586
      %v623 = vunpack.c.l.b16 %v587
      %v624 = vunpack.c.l.b16 %v588
      %v625 = vunpack.c.l.b16 %v589
      %v626 = vunpack.c.l.b16 %v590
      %v627 = vunpack.c.l.b16 %v591
      %v628 = vunpack.c.l.b16 %v592
      %v629 = vunpack.c.l.b16 %v593
      %v630 = vunpack.c.l.b16 %v594
      %v631 = vunpack.c.l.b16 %v595
      %v632 = vunpack.c.l.b16 %v596
      %v633 = vunpack.c.l.b16 %v597
      %v634 = vunpack.c.l.b16 %v598
      %v635 = vpack.c.b16 %v618, %v617
      %v636 = vpack.c.b16 %v620, %v619
      %v637 = vpack.c.b16 %v622, %v621
      %v638 = vpack.c.b16 %v624, %v623
      %v639 = vpack.c.b16 %v626, %v625
      %v640 = vpack.c.b16 %v628, %v627
      %v641 = vpack.c.b16 %v630, %v629
      %v642 = vpack.c.b16 %v632, %v631
      %v643 = vpack.c.b16 %v634, %v633
      %v645 = vsel %vm251, %v635, 0
      %v648 = vsel %vm251, %v636, 0
      %v651 = vsel %vm251, %v637, 0
      %v654 = vsel %vm251, %v638, 0
      %v657 = vsel %vm251, %v639, 0
      %v660 = vsel %vm251, %v640, 0
      %v663 = vsel %vm251, %v641, 0
      %v666 = vsel %vm251, %v642, 0
      %v669 = vsel %vm251, %v643, 0
      %671 = vmatprep.subr.bf16.mxu0 0
      %672 = vmatpush1.bf16.msra.mxu0 0
      %673 = vmatprep.subr.bf16.mxu0 0
      %674 = vmatpush1.bf16.msra.mxu0 0
      %675 = vmatprep.subr.bf16.mxu0 0
      %676 = vmatpush1.bf16.msra.mxu0 0
      %677 = vmatprep.subr.bf16.mxu0 0
      %678 = vmatpush1.bf16.msra.mxu0 0
      %679 = vmatprep.subr.bf16.mxu0 0
      %680 = vmatpush1.bf16.msra.mxu0 0
      %681 = vmatprep.subr.bf16.mxu0 0
      %682 = vmatpush1.bf16.msra.mxu0 0
      %683 = vmatprep.subr.bf16.mxu0 0
      %684 = vmatpush1.bf16.msra.mxu0 %v248
      %685 = vmatprep.subr.bf16.mxu0 0
      %686 = vmatpush1.bf16.msra.mxu0 %v247
      %687 = vmatprep.subr.bf16.mxu0 0
      %688 = vmatpush2.bf16.msra.mxu0 0
      %689 = vmatprep.subr.bf16.mxu0 0
      %690 = vmatpush2.bf16.msra.mxu0 0
      %691 = vmatprep.subr.bf16.mxu0 0
      %692 = vmatpush2.bf16.msra.mxu0 0
      %693 = vmatprep.subr.bf16.mxu0 0
      %694 = vmatpush2.bf16.msra.mxu0 0
      %695 = vmatprep.subr.bf16.mxu0 0
      %696 = vmatpush2.bf16.msra.mxu0 0
      %697 = vmatprep.subr.bf16.mxu0 0
      %698 = vmatpush2.bf16.msra.mxu0 0
      %699 = vmatprep.subr.bf16.mxu0 0
      %700 = vmatpush2.bf16.msra.mxu0 0
      %701 = vmatprep.subr.bf16.mxu0 0
      %702 = vmatpush2.bf16.msra.mxu0 0
      %703 = vmatprep.mubr.bf16.mxu0 0
      %704 = vmatmul.mubr.bf16.gmra.mxu0 %v645
      %v705 = vpop.f32.mrf.mxu0
      %v706 = vadd.f32 0.0, %v705
      %v707 = vpop.f32.mrf.mxu0
      %v708 = vpop.f32.mrf.mxu0
      %v709 = vadd.f32 0.0, %v708
      %v710 = vpop.f32.mrf.mxu0
      %711 = vmatprep.mubr.bf16.mxu0 0
      %712 = vmatmul.mubr.bf16.gmra.mxu0 %v648
      %v713 = vpop.f32.mrf.mxu0
      %v714 = vadd.f32 0.0, %v713
      %v715 = vpop.f32.mrf.mxu0
      %v716 = vpop.f32.mrf.mxu0
      %v717 = vadd.f32 0.0, %v716
      %v718 = vpop.f32.mrf.mxu0
      %719 = vmatprep.mubr.bf16.mxu0 0
      %720 = vmatmul.mubr.bf16.gmra.mxu0 %v651
      %v721 = vpop.f32.mrf.mxu0
      %v722 = vadd.f32 0.0, %v721
      %v723 = vpop.f32.mrf.mxu0
      %v724 = vpop.f32.mrf.mxu0
      %v725 = vadd.f32 0.0, %v724
      %v726 = vpop.f32.mrf.mxu0
      %727 = vmatprep.mubr.bf16.mxu0 0
      %728 = vmatmul.mubr.bf16.gmra.mxu0 %v654
      %v729 = vpop.f32.mrf.mxu0
      %v730 = vadd.f32 0.0, %v729
      %v731 = vpop.f32.mrf.mxu0
      %v732 = vpop.f32.mrf.mxu0
      %v733 = vadd.f32 0.0, %v732
      %v734 = vpop.f32.mrf.mxu0
      %735 = vmatprep.mubr.bf16.mxu0 0
      %736 = vmatmul.mubr.bf16.gmra.mxu0 %v657
      %v737 = vpop.f32.mrf.mxu0
      %v738 = vadd.f32 0.0, %v737
      %v739 = vpop.f32.mrf.mxu0
      %v740 = vpop.f32.mrf.mxu0
      %v741 = vadd.f32 0.0, %v740
      %v742 = vpop.f32.mrf.mxu0
      %743 = vmatprep.mubr.bf16.mxu0 0
      %744 = vmatmul.mubr.bf16.gmra.mxu0 %v660
      %v745 = vpop.f32.mrf.mxu0
      %v746 = vadd.f32 0.0, %v745
      %v747 = vpop.f32.mrf.mxu0
      %v748 = vpop.f32.mrf.mxu0
      %v749 = vadd.f32 0.0, %v748
      %v750 = vpop.f32.mrf.mxu0
      %751 = vmatprep.mubr.bf16.mxu0 0
      %752 = vmatmul.mubr.bf16.gmra.mxu0 %v663
      %v753 = vpop.f32.mrf.mxu0
      %v754 = vadd.f32 0.0, %v753
      %v755 = vpop.f32.mrf.mxu0
      %v756 = vpop.f32.mrf.mxu0
      %v757 = vadd.f32 0.0, %v756
      %v758 = vpop.f32.mrf.mxu0
      %759 = vmatprep.mubr.bf16.mxu0 0
      %760 = vmatmul.mubr.bf16.gmra.mxu0 %v666
      %v761 = vpop.f32.mrf.mxu0
      %v762 = vadd.f32 0.0, %v761
      %v763 = vpop.f32.mrf.mxu0
      %v764 = vpop.f32.mrf.mxu0
      %v765 = vadd.f32 0.0, %v764
      %v766 = vpop.f32.mrf.mxu0
      %767 = vmatprep.mubr.bf16.mxu0 0
      %768 = vmatmul.mubr.bf16.gmra.mxu0 %v669
      %v769 = vpop.f32.mrf.mxu0
      %v770 = vadd.f32 0.0, %v769
      %v771 = vpop.f32.mrf.mxu0
      %v772 = vpop.f32.mrf.mxu0
      %v773 = vadd.f32 0.0, %v772
      %v774 = vpop.f32.mrf.mxu0
      %775 = vdwg.mxu0
      %s776 = scalar_lea.vmem %s165, 216
      %v777 = vld [vmem:[%s776] sm:$0xf]
      %v778 = vld [vmem:[%s776 + $0x4] sm:$0xf]
      %v779 = vld [vmem:[%s776 + $0x8] sm:$0xf]
      %v780 = vld [vmem:[%s776 + $0xc] sm:$0xf]
      %v781 = vld [vmem:[%s776 + $0x10] sm:$0xf]
      %v782 = vld [vmem:[%s776 + $0x14] sm:$0xf]
      %v783 = vld [vmem:[%s776 + $0x18] sm:$0xf]
      %v784 = vld [vmem:[%s776 + $0x1c] sm:$0xf]
      %v785 = vld [vmem:[%s776 + $0x20] sm:$0xf]
      %v786 = vld [vmem:[%s776 + $0x24] sm:$0xf]
      %v787 = vld [vmem:[%s776 + $0x28] sm:$0xf]
      %v788 = vld [vmem:[%s776 + $0x2c] sm:$0xf]
      %v789 = vld [vmem:[%s776 + $0x30] sm:$0xf]
      %v790 = vld [vmem:[%s776 + $0x34] sm:$0xf]
      %v791 = vld [vmem:[%s776 + $0x38] sm:$0xf]
      %v792 = vld [vmem:[%s776 + $0x3c] sm:$0xf]
      %v793 = vld [vmem:[%s776 + $0x40] sm:$0xf]
      %v794 = vld [vmem:[%s776 + $0x44] sm:$0xf]
      %v813 = vunpack.c.l.b16 %v777
      %v814 = vunpack.c.l.b16 %v778
      %v815 = vunpack.c.l.b16 %v779
      %v816 = vunpack.c.l.b16 %v780
      %v817 = vunpack.c.l.b16 %v781
      %v818 = vunpack.c.l.b16 %v782
      %v819 = vunpack.c.l.b16 %v783
      %v820 = vunpack.c.l.b16 %v784
      %v821 = vunpack.c.l.b16 %v785
      %v822 = vunpack.c.l.b16 %v786
      %v823 = vunpack.c.l.b16 %v787
      %v824 = vunpack.c.l.b16 %v788
      %v825 = vunpack.c.l.b16 %v789
      %v826 = vunpack.c.l.b16 %v790
      %v827 = vunpack.c.l.b16 %v791
      %v828 = vunpack.c.l.b16 %v792
      %v829 = vunpack.c.l.b16 %v793
      %v830 = vunpack.c.l.b16 %v794
      %v831 = vpack.c.b16 %v814, %v813
      %v832 = vpack.c.b16 %v816, %v815
      %v833 = vpack.c.b16 %v818, %v817
      %v834 = vpack.c.b16 %v820, %v819
      %v835 = vpack.c.b16 %v822, %v821
      %v836 = vpack.c.b16 %v824, %v823
      %v837 = vpack.c.b16 %v826, %v825
      %v838 = vpack.c.b16 %v828, %v827
      %v839 = vpack.c.b16 %v830, %v829
      %v841 = vsel %vm251, %v831, 0
      %v844 = vsel %vm251, %v832, 0
      %v847 = vsel %vm251, %v833, 0
      %v850 = vsel %vm251, %v834, 0
      %v853 = vsel %vm251, %v835, 0
      %v856 = vsel %vm251, %v836, 0
      %v859 = vsel %vm251, %v837, 0
      %v862 = vsel %vm251, %v838, 0
      %v865 = vsel %vm251, %v839, 0
      %867 = vmatprep.subr.bf16.mxu0 0
      %868 = vmatpush1.bf16.msra.mxu0 0
      %869 = vmatprep.subr.bf16.mxu0 0
      %870 = vmatpush1.bf16.msra.mxu0 0
      %871 = vmatprep.subr.bf16.mxu0 0
      %872 = vmatpush1.bf16.msra.mxu0 0
      %873 = vmatprep.subr.bf16.mxu0 0
      %874 = vmatpush1.bf16.msra.mxu0 0
      %875 = vmatprep.subr.bf16.mxu0 0
      %876 = vmatpush1.bf16.msra.mxu0 0
      %877 = vmatprep.subr.bf16.mxu0 0
      %878 = vmatpush1.bf16.msra.mxu0 0
      %879 = vmatprep.subr.bf16.mxu0 0
      %880 = vmatpush1.bf16.msra.mxu0 %v248
      %881 = vmatprep.subr.bf16.mxu0 0
      %882 = vmatpush1.bf16.msra.mxu0 %v247
      %883 = vmatprep.subr.bf16.mxu0 0
      %884 = vmatpush2.bf16.msra.mxu0 0
      %885 = vmatprep.subr.bf16.mxu0 0
      %886 = vmatpush2.bf16.msra.mxu0 0
      %887 = vmatprep.subr.bf16.mxu0 0
      %888 = vmatpush2.bf16.msra.mxu0 0
      %889 = vmatprep.subr.bf16.mxu0 0
      %890 = vmatpush2.bf16.msra.mxu0 0
      %891 = vmatprep.subr.bf16.mxu0 0
      %892 = vmatpush2.bf16.msra.mxu0 0
      %893 = vmatprep.subr.bf16.mxu0 0
      %894 = vmatpush2.bf16.msra.mxu0 0
      %895 = vmatprep.subr.bf16.mxu0 0
      %896 = vmatpush2.bf16.msra.mxu0 0
      %897 = vmatprep.subr.bf16.mxu0 0
      %898 = vmatpush2.bf16.msra.mxu0 0
      %899 = vmatprep.mubr.bf16.mxu0 0
      %900 = vmatmul.mubr.bf16.gmra.mxu0 %v841
      %v901 = vpop.f32.mrf.mxu0
      %v902 = vadd.f32 0.0, %v901
      %v903 = vpop.f32.mrf.mxu0
      %v904 = vpop.f32.mrf.mxu0
      %v905 = vadd.f32 0.0, %v904
      %v906 = vpop.f32.mrf.mxu0
      %907 = vmatprep.mubr.bf16.mxu0 0
      %908 = vmatmul.mubr.bf16.gmra.mxu0 %v844
      %v909 = vpop.f32.mrf.mxu0
      %v910 = vadd.f32 0.0, %v909
      %v911 = vpop.f32.mrf.mxu0
      %v912 = vpop.f32.mrf.mxu0
      %v913 = vadd.f32 0.0, %v912
      %v914 = vpop.f32.mrf.mxu0
      %915 = vmatprep.mubr.bf16.mxu0 0
      %916 = vmatmul.mubr.bf16.gmra.mxu0 %v847
      %v917 = vpop.f32.mrf.mxu0
      %v918 = vadd.f32 0.0, %v917
      %v919 = vpop.f32.mrf.mxu0
      %v920 = vpop.f32.mrf.mxu0
      %v921 = vadd.f32 0.0, %v920
      %v922 = vpop.f32.mrf.mxu0
      %923 = vmatprep.mubr.bf16.mxu0 0
      %924 = vmatmul.mubr.bf16.gmra.mxu0 %v850
      %v925 = vpop.f32.mrf.mxu0
      %v926 = vadd.f32 0.0, %v925
      %v927 = vpop.f32.mrf.mxu0
      %v928 = vpop.f32.mrf.mxu0
      %v929 = vadd.f32 0.0, %v928
      %v930 = vpop.f32.mrf.mxu0
      %931 = vmatprep.mubr.bf16.mxu0 0
      %932 = vmatmul.mubr.bf16.gmra.mxu0 %v853
      %v933 = vpop.f32.mrf.mxu0
      %v934 = vadd.f32 0.0, %v933
      %v935 = vpop.f32.mrf.mxu0
      %v936 = vpop.f32.mrf.mxu0
      %v937 = vadd.f32 0.0, %v936
      %v938 = vpop.f32.mrf.mxu0
      %939 = vmatprep.mubr.bf16.mxu0 0
      %940 = vmatmul.mubr.bf16.gmra.mxu0 %v856
      %v941 = vpop.f32.mrf.mxu0
      %v942 = vadd.f32 0.0, %v941
      %v943 = vpop.f32.mrf.mxu0
      %v944 = vpop.f32.mrf.mxu0
      %v945 = vadd.f32 0.0, %v944
      %v946 = vpop.f32.mrf.mxu0
      %947 = vmatprep.mubr.bf16.mxu0 0
      %948 = vmatmul.mubr.bf16.gmra.mxu0 %v859
      %v949 = vpop.f32.mrf.mxu0
      %v950 = vadd.f32 0.0, %v949
      %v951 = vpop.f32.mrf.mxu0
      %v952 = vpop.f32.mrf.mxu0
      %v953 = vadd.f32 0.0, %v952
      %v954 = vpop.f32.mrf.mxu0
      %955 = vmatprep.mubr.bf16.mxu0 0
      %956 = vmatmul.mubr.bf16.gmra.mxu0 %v862
      %v957 = vpop.f32.mrf.mxu0
      %v958 = vadd.f32 0.0, %v957
      %v959 = vpop.f32.mrf.mxu0
      %v960 = vpop.f32.mrf.mxu0
      %v961 = vadd.f32 0.0, %v960
      %v962 = vpop.f32.mrf.mxu0
      %963 = vmatprep.mubr.bf16.mxu0 0
      %964 = vmatmul.mubr.bf16.gmra.mxu0 %v865
      %v965 = vpop.f32.mrf.mxu0
      %v966 = vadd.f32 0.0, %v965
      %v967 = vpop.f32.mrf.mxu0
      %v968 = vpop.f32.mrf.mxu0
      %v969 = vadd.f32 0.0, %v968
      %v970 = vpop.f32.mrf.mxu0
      %971 = vdwg.mxu0
      %v972 = vmax.f32 %v314, %v510
      %v973 = vmax.f32 %v317, %v513
      %v974 = vmax.f32 %v322, %v518
      %v975 = vmax.f32 %v325, %v521
      %v976 = vmax.f32 %v330, %v526
      %v977 = vmax.f32 %v333, %v529
      %v978 = vmax.f32 %v338, %v534
      %v979 = vmax.f32 %v341, %v537
      %v980 = vmax.f32 %v346, %v542
      %v981 = vmax.f32 %v349, %v545
      %v982 = vmax.f32 %v354, %v550
      %v983 = vmax.f32 %v357, %v553
      %v984 = vmax.f32 %v362, %v558
      %v985 = vmax.f32 %v365, %v561
      %v986 = vmax.f32 %v370, %v566
      %v987 = vmax.f32 %v373, %v569
      %v988 = vmax.f32 %v378, %v574
      %v989 = vmax.f32 %v381, %v577
      %v990 = vmax.f32 %v706, %v902
      %v991 = vmax.f32 %v709, %v905
      %v992 = vmax.f32 %v714, %v910
      %v993 = vmax.f32 %v717, %v913
      %v994 = vmax.f32 %v722, %v918
      %v995 = vmax.f32 %v725, %v921
      %v996 = vmax.f32 %v730, %v926
      %v997 = vmax.f32 %v733, %v929
      %v998 = vmax.f32 %v738, %v934
      %v999 = vmax.f32 %v741, %v937
      %v1000 = vmax.f32 %v746, %v942
      %v1001 = vmax.f32 %v749, %v945
      %v1002 = vmax.f32 %v754, %v950
      %v1003 = vmax.f32 %v757, %v953
      %v1004 = vmax.f32 %v762, %v958
      %v1005 = vmax.f32 %v765, %v961
      %v1006 = vmax.f32 %v770, %v966
      %v1007 = vmax.f32 %v773, %v969
      %v1008 = vmax.f32 %v972, %v990
      %v1009 = vmax.f32 %v973, %v991
      %v1010 = vmax.f32 %v974, %v992
      %v1011 = vmax.f32 %v975, %v993
      %v1012 = vmax.f32 %v976, %v994
      %v1013 = vmax.f32 %v977, %v995
      %v1014 = vmax.f32 %v978, %v996
      %v1015 = vmax.f32 %v979, %v997
      %v1016 = vmax.f32 %v980, %v998
      %v1017 = vmax.f32 %v981, %v999
      %v1018 = vmax.f32 %v982, %v1000
      %v1019 = vmax.f32 %v983, %v1001
      %v1020 = vmax.f32 %v984, %v1002
      %v1021 = vmax.f32 %v985, %v1003
      %v1022 = vmax.f32 %v986, %v1004
      %v1023 = vmax.f32 %v987, %v1005
      %v1024 = vmax.f32 %v988, %v1006
      %v1025 = vmax.f32 %v989, %v1007
      %v1026 = vld [vmem:[%s2] sm:$0x1]
      %v1028 = vlaneseq
      %v1029 = vshrl.u32 %v1028, 7
      %v1030 = vsub.s32 0, %v1029
      %v1031 = vrot.slane %v1026, %v1030
      %v1033 = vadd.f32 %v1008, %v1031
      %v1034 = vadd.f32 %v1009, %v1031
      %v1035 = vadd.f32 %v1010, %v1031
      %v1036 = vadd.f32 %v1011, %v1031
      %v1037 = vadd.f32 %v1012, %v1031
      %v1038 = vadd.f32 %v1013, %v1031
      %v1039 = vadd.f32 %v1014, %v1031
      %v1040 = vadd.f32 %v1015, %v1031
      %v1041 = vadd.f32 %v1016, %v1031
      %v1042 = vadd.f32 %v1017, %v1031
      %v1043 = vadd.f32 %v1018, %v1031
      %v1044 = vadd.f32 %v1019, %v1031
      %v1045 = vadd.f32 %v1020, %v1031
      %v1046 = vadd.f32 %v1021, %v1031
      %v1047 = vadd.f32 %v1022, %v1031
      %v1048 = vadd.f32 %v1023, %v1031
      %v1049 = vadd.f32 %v1024, %v1031
      %v1050 = vadd.f32 %v1025, %v1031
      %v1051 = vmax.f32 %v1033, 0.0
      %v1052 = vmax.f32 %v1034, 0.0
      %v1053 = vmax.f32 %v1035, 0.0
      %v1054 = vmax.f32 %v1036, 0.0
      %v1055 = vmax.f32 %v1037, 0.0
      %v1056 = vmax.f32 %v1038, 0.0
      %v1057 = vmax.f32 %v1039, 0.0
      %v1058 = vmax.f32 %v1040, 0.0
      %v1059 = vmax.f32 %v1041, 0.0
      %v1060 = vmax.f32 %v1042, 0.0
      %v1061 = vmax.f32 %v1043, 0.0
      %v1062 = vmax.f32 %v1044, 0.0
      %v1063 = vmax.f32 %v1045, 0.0
      %v1064 = vmax.f32 %v1046, 0.0
      %v1065 = vmax.f32 %v1047, 0.0
      %v1066 = vmax.f32 %v1048, 0.0
      %v1067 = vmax.f32 %v1049, 0.0
      %v1068 = vmax.f32 %v1050, 0.0
      %v1069 = vpack.c.bf16 %v1052, %v1051
      %v1070 = vpack.c.bf16 %v1054, %v1053
      %v1071 = vpack.c.bf16 %v1056, %v1055
      %v1072 = vpack.c.bf16 %v1058, %v1057
      %v1073 = vpack.c.bf16 %v1060, %v1059
      %v1074 = vpack.c.bf16 %v1062, %v1061
      %v1075 = vpack.c.bf16 %v1064, %v1063
      %v1076 = vpack.c.bf16 %v1066, %v1065
      %v1077 = vpack.c.bf16 %v1068, %v1067
      %v1087 = vunpack.c.l.b16 %v1069
      %v1088 = vunpack.c.h.b16 %v1069
      %v1089 = vunpack.c.l.b16 %v1070
      %v1090 = vunpack.c.h.b16 %v1070
      %v1091 = vunpack.c.l.b16 %v1071
      %v1092 = vunpack.c.h.b16 %v1071
      %v1093 = vunpack.c.l.b16 %v1072
      %v1094 = vunpack.c.h.b16 %v1072
      %v1095 = vunpack.c.l.b16 %v1073
      %v1096 = vunpack.c.h.b16 %v1073
      %v1097 = vunpack.c.l.b16 %v1074
      %v1098 = vunpack.c.h.b16 %v1074
      %v1099 = vunpack.c.l.b16 %v1075
      %v1100 = vunpack.c.h.b16 %v1075
      %v1101 = vunpack.c.l.b16 %v1076
      %v1102 = vunpack.c.h.b16 %v1076
      %v1103 = vunpack.c.l.b16 %v1077
      %v1104 = vunpack.c.h.b16 %v1077
      %v1105 = vpack.c.b16 %v1087, %v1087
      %v1106 = vpack.c.b16 %v1088, %v1088
      %v1107 = vpack.c.b16 %v1089, %v1089
      %v1108 = vpack.c.b16 %v1090, %v1090
      %v1109 = vpack.c.b16 %v1091, %v1091
      %v1110 = vpack.c.b16 %v1092, %v1092
      %v1111 = vpack.c.b16 %v1093, %v1093
      %v1112 = vpack.c.b16 %v1094, %v1094
      %v1113 = vpack.c.b16 %v1095, %v1095
      %v1114 = vpack.c.b16 %v1096, %v1096
      %v1115 = vpack.c.b16 %v1097, %v1097
      %v1116 = vpack.c.b16 %v1098, %v1098
      %v1117 = vpack.c.b16 %v1099, %v1099
      %v1118 = vpack.c.b16 %v1100, %v1100
      %v1119 = vpack.c.b16 %v1101, %v1101
      %v1120 = vpack.c.b16 %v1102, %v1102
      %v1121 = vpack.c.b16 %v1103, %v1103
      %v1122 = vpack.c.b16 %v1104, %v1104
      %1141 = vst [vmem:[%s170] sm:$0xf] %v1105
      %1142 = vst [vmem:[%s170 + $0x4] sm:$0xf] %v1106
      %1143 = vst [vmem:[%s170 + $0x8] sm:$0xf] %v1107
      %1144 = vst [vmem:[%s170 + $0xc] sm:$0xf] %v1108
      %1145 = vst [vmem:[%s170 + $0x10] sm:$0xf] %v1109
      %1146 = vst [vmem:[%s170 + $0x14] sm:$0xf] %v1110
      %1147 = vst [vmem:[%s170 + $0x18] sm:$0xf] %v1111
      %1148 = vst [vmem:[%s170 + $0x1c] sm:$0xf] %v1112
      %1149 = vst [vmem:[%s170 + $0x20] sm:$0xf] %v1113
      %1150 = vst [vmem:[%s170 + $0x24] sm:$0xf] %v1114
      %1151 = vst [vmem:[%s170 + $0x28] sm:$0xf] %v1115
      %1152 = vst [vmem:[%s170 + $0x2c] sm:$0xf] %v1116
      %1153 = vst [vmem:[%s170 + $0x30] sm:$0xf] %v1117
      %1154 = vst [vmem:[%s170 + $0x34] sm:$0xf] %v1118
      %1155 = vst [vmem:[%s170 + $0x38] sm:$0xf] %v1119
      %1156 = vst [vmem:[%s170 + $0x3c] sm:$0xf] %v1120
      %1157 = vst [vmem:[%s170 + $0x40] sm:$0xf] %v1121
      %1158 = vst [vmem:[%s170 + $0x44] sm:$0xf] %v1122
      %p1159 = scmp.lt.s32.totalorder %s14, 1
      %s1160 = scalar_select %p1159, %s14, 1
      %s1161 = smul.addr %s1160, 18
      %s1162 = smul.addr %s1161, 4
      %s1163 = scalar_lea.vmem %s3, %s1162
      // Predicated region
      $region33: #{simple_cnn_forward.3} parent=31 // pred_check
        %p1164 = pneg %p100
      $region34: #{simple_cnn_forward.3} parent=31 // pred_check_branch
        %1166 = sbr.rel (%p1164) target = $region36
      $region35: #{simple_cnn_forward.3} parent=31 // pred_region
        _
      $region36: #{simple_cnn_forward.3} parent=31 // pred_fallthru
        _
    $region32: #{simple_cnn_forward.3} parent=5 // pred_fallthru
      _
    %p1167 = scmp.le.s32.totalorder 2, %s9
    // Predicated region
    $region37: #{simple_cnn_forward.3} parent=5 // pred_check
      %p1168 = pneg %p1167
    $region38: #{simple_cnn_forward.3} parent=5 // pred_check_branch
      %1170 = sbr.rel (%p1168) target = $region40
    $region39: #{simple_cnn_forward.3} parent=5 // pred_region
      %s1171 = ssub.s32 %s9, 2
      // Predicated region
      $region41: #{simple_cnn_forward.3} parent=39 // pred_check
        %p1172 = pneg %p106
      $region42: #{simple_cnn_forward.3} parent=39 // pred_check_branch
        %1174 = sbr.rel (%p1172) target = $region44
      $region43: #{simple_cnn_forward.3} parent=39 // pred_region
        %p1175 = scmp.lt.s32.totalorder %s15, 1
        %s1176 = scalar_select %p1175, %s15, 1
        %s1177 = smul.addr %s1176, 18
        %s1178 = smul.addr %s1177, 4
        %s1179 = scalar_lea.vmem %s3, %s1178
      $region44: #{simple_cnn_forward.3} parent=39 // pred_fallthru
        _
    $region40: #{simple_cnn_forward.3} parent=5 // pred_fallthru
      _
  $region6: #{simple_cnn_forward.3} parent=0 // loop_footer
    %s13 = sadd.s32 1, %s9
  $region7: #{simple_cnn_forward.3} parent=0 // loop_footer_branch
    %8 = sbr.rel target = $region3
  $region8: #{simple_cnn_forward.3} parent=0 // loop_exit
    _

// kernel: simple_cnn_forward.4
$region0: #{simple_cnn_forward.4}
  #allocation0 [shape = 'u32[]', space=smem, size = 0x4, offset = 0x4, fixed_abs, tag = 'smem constant byte address 0x4 - core index']
  #allocation1 [shape = 'u32[144,128]{1,0:T(1,128)}', space=vmem, size = 0x12000, scoped, tag = 'internal scratch']
  %s0 = inlined_call_operand.vmem [shape: bf16[2,4,16,256], index: 0, kind: input, shape index: {}]
  %s1 = inlined_call_operand.vmem [shape: bf16[256,128], index: 1, kind: input, shape index: {}]
  %s2 = inlined_call_operand.vmem [shape: f32[1,128], index: 2, kind: input, shape index: {}]
  %s3 = inlined_call_operand.vmem [shape: bf16[2,16,128], index: 3, kind: output, shape index: {}]
  %s4 = sld [smem:[#allocation0]]
  $region45: #{simple_cnn_forward.4} parent=0
    _
  %s6 = ssub.s32 1, %s4
  %s7 = scalar_select 0, %s6, %s4
  loop: start=0, step=1, limit=4
  $region2: #{simple_cnn_forward.4} parent=0 // loop_pre_header
    _
  $region3: #{simple_cnn_forward.4} parent=0 // loop_header
    %s9 = sphi 0, %s13
    %p10 = scmp.ge.s32.totalorder %s9, 4
    %s19 = sphi 0, %s21
    %s22 = sphi 0, %s19
    %s23 = sphi 0, %s22
    %s39 = sphi 0, %s23
    %s43 = sphi 0, %s43
    %s45 = sphi 0, %s43
    %s46 = sphi 0, %s45
    %s60 = sphi 0, %s46
    %s64 = sphi 0, %s64
    %s66 = sphi 0, %s64
    %s67 = sphi 0, %s66
    %s81 = sphi 0, %s67
    %s87 = sphi 0, %s89
    %s90 = sphi 0, %s87
    %s91 = sphi 0, %s90
    %s107 = sphi 0, %s91
  $region4: #{simple_cnn_forward.4} parent=0 // loop_header_branch
    %12 = sbr.rel (%p10) target = $region8
  $region5: #{simple_cnn_forward.4} parent=0 // loop_body
    %s14 = ssub.s32 %s9, 1
    %s15 = ssub.s32 %s9, 2
    %s16 = sadd.s32 %s9, 1
    %s17 = ssub.s32 %s9, %s16
    %p18 = scmp.eq.s32.totalorder %s17, 0
    %s20 = sadd.s32 %s19, 1
    %s21 = scalar_select %p18, %s19, %s20
    %p24 = pneg %p18
    %p25 = scmp.eq.s32.totalorder %s9, 1
    %p26 = por %p24, %p25
    %p27 = scmp.ne.s32.totalorder %s19, %s22
    %p28 = scmp.eq.s32.totalorder %s9, 0
    %p29 = por %p27, %p28
    %p30 = scmp.ne.s32.totalorder %s19, %s22
    %p31 = scmp.eq.s32.totalorder %s14, 1
    %p32 = por %p30, %p31
    %p33 = scmp.ne.s32.totalorder %s22, %s23
    %p34 = scmp.eq.s32.totalorder %s14, 0
    %p35 = por %p33, %p34
    %p36 = scmp.ne.s32.totalorder %s22, %s23
    %p37 = scmp.eq.s32.totalorder %s15, 1
    %p38 = por %p36, %p37
    %p40 = scmp.ne.s32.totalorder %s23, %s39
    %p41 = scmp.eq.s32.totalorder %s15, 0
    %p42 = por %p40, %p41
    %s44 = sadd.s32 %s43, 1
    %p47 = scmp.eq.s32.totalorder %s9, 1
    %p48 = scmp.ne.s32.totalorder %s43, %s45
    %p49 = scmp.eq.s32.totalorder %s9, 0
    %p50 = por %p48, %p49
    %p51 = scmp.ne.s32.totalorder %s43, %s45
    %p52 = scmp.eq.s32.totalorder %s14, 1
    %p53 = por %p51, %p52
    %p54 = scmp.ne.s32.totalorder %s45, %s46
    %p55 = scmp.eq.s32.totalorder %s14, 0
    %p56 = por %p54, %p55
    %p57 = scmp.ne.s32.totalorder %s45, %s46
    %p58 = scmp.eq.s32.totalorder %s15, 1
    %p59 = por %p57, %p58
    %p61 = scmp.ne.s32.totalorder %s46, %s60
    %p62 = scmp.eq.s32.totalorder %s15, 0
    %p63 = por %p61, %p62
    %s65 = sadd.s32 %s64, 1
    %p68 = scmp.eq.s32.totalorder %s9, 1
    %p69 = scmp.ne.s32.totalorder %s64, %s66
    %p70 = scmp.eq.s32.totalorder %s9, 0
    %p71 = por %p69, %p70
    %p72 = scmp.ne.s32.totalorder %s64, %s66
    %p73 = scmp.eq.s32.totalorder %s14, 1
    %p74 = por %p72, %p73
    %p75 = scmp.ne.s32.totalorder %s66, %s67
    %p76 = scmp.eq.s32.totalorder %s14, 0
    %p77 = por %p75, %p76
    %p78 = scmp.ne.s32.totalorder %s66, %s67
    %p79 = scmp.eq.s32.totalorder %s15, 1
    %p80 = por %p78, %p79
    %p82 = scmp.ne.s32.totalorder %s67, %s81
    %p83 = scmp.eq.s32.totalorder %s15, 0
    %p84 = por %p82, %p83
    %s85 = ssub.s32 %s9, %s16
    %p86 = scmp.eq.s32.totalorder %s85, 0
    %s88 = sadd.s32 %s87, 1
    %s89 = scalar_select %p86, %s87, %s88
    %p92 = pneg %p86
    %p93 = scmp.eq.s32.totalorder %s9, 1
    %p94 = por %p92, %p93
    %p95 = scmp.ne.s32.totalorder %s87, %s90
    %p96 = scmp.eq.s32.totalorder %s9, 0
    %p97 = por %p95, %p96
    %p98 = scmp.ne.s32.totalorder %s87, %s90
    %p99 = scmp.eq.s32.totalorder %s14, 1
    %p100 = por %p98, %p99
    %p101 = scmp.ne.s32.totalorder %s90, %s91
    %p102 = scmp.eq.s32.totalorder %s14, 0
    %p103 = por %p101, %p102
    %p104 = scmp.ne.s32.totalorder %s90, %s91
    %p105 = scmp.eq.s32.totalorder %s15, 1
    %p106 = por %p104, %p105
    %p108 = scmp.ne.s32.totalorder %s91, %s107
    %p109 = scmp.eq.s32.totalorder %s15, 0
    %p110 = por %p108, %p109
    %p111 = scmp.le.s32.totalorder 1, %s9
    %p112 = scmp.lt.s32.totalorder %s9, 3
    %p113 = pnand %p111, %p112
    %p114 = pneg %p113
    // Predicated region
    $region9: #{simple_cnn_forward.4} parent=5 // pred_check
      _
    $region10: #{simple_cnn_forward.4} parent=5 // pred_check_branch
      %116 = sbr.rel (%p113) target = $region12
    $region11: #{simple_cnn_forward.4} parent=5 // pred_region
      %s117 = ssub.s32 %s9, 1
      // Predicated region
      $region13: #{simple_cnn_forward.4} parent=11 // pred_check
        %p118 = pneg %p56
      $region14: #{simple_cnn_forward.4} parent=11 // pred_check_branch
        %120 = sbr.rel (%p118) target = $region16
      $region15: #{simple_cnn_forward.4} parent=11 // pred_region
        _
      $region16: #{simple_cnn_forward.4} parent=11 // pred_fallthru
        _
      // Predicated region
      $region17: #{simple_cnn_forward.4} parent=11 // pred_check
        %p121 = pneg %p77
      $region18: #{simple_cnn_forward.4} parent=11 // pred_check_branch
        %123 = sbr.rel (%p121) target = $region20
      $region19: #{simple_cnn_forward.4} parent=11 // pred_region
        _
      $region20: #{simple_cnn_forward.4} parent=11 // pred_fallthru
        _
    $region12: #{simple_cnn_forward.4} parent=5 // pred_fallthru
      _
    %p124 = scmp.lt.s32.totalorder %s9, 2
    // Predicated region
    $region21: #{simple_cnn_forward.4} parent=5 // pred_check
      %p125 = pneg %p124
    $region22: #{simple_cnn_forward.4} parent=5 // pred_check_branch
      %127 = sbr.rel (%p125) target = $region24
    $region23: #{simple_cnn_forward.4} parent=5 // pred_region
      // Predicated region
      $region25: #{simple_cnn_forward.4} parent=23 // pred_check
        %p128 = pneg %p29
      $region26: #{simple_cnn_forward.4} parent=23 // pred_check_branch
        %130 = sbr.rel (%p128) target = $region28
      $region27: #{simple_cnn_forward.4} parent=23 // pred_region
        %p131 = scmp.lt.s32.totalorder %s9, 1
        %s132 = scalar_select %p131, %s9, 1
        %s133 = smul.addr %s132, 16
        %s134 = smul.addr %s133, 4
        %s135 = scalar_lea.vmem %s0, %s134
      $region28: #{simple_cnn_forward.4} parent=23 // pred_fallthru
        _
    $region24: #{simple_cnn_forward.4} parent=5 // pred_fallthru
      _
    %p136 = scmp.le.s32.totalorder 1, %s9
    %p137 = scmp.lt.s32.totalorder %s9, 3
    %p138 = pnand %p136, %p137
    %p139 = pneg %p138
    // Predicated region
    $region29: #{simple_cnn_forward.4} parent=5 // pred_check
      _
    $region30: #{simple_cnn_forward.4} parent=5 // pred_check_branch
      %141 = sbr.rel (%p138) target = $region32
    $region31: #{simple_cnn_forward.4} parent=5 // pred_region
      %s142 = ssub.s32 %s9, 1
      %p143 = scmp.lt.s32.totalorder %s14, 1
      %s144 = scalar_select %p143, %s14, 1
      %s145 = smul.addr %s144, 16
      %s146 = smul.addr %s145, 4
      %s147 = scalar_lea.vmem %s0, %s146
      %p148 = pneg %p35
      %p149 = pneg %p32
      %p150 = pneg %p56
      %p151 = pneg %p53
      %p152 = pneg %p77
      %p153 = pneg %p74
      %p154 = pneg %p103
      %p155 = pneg %p100
      %p156 = scmp.lt.s32.totalorder %s14, 1
      %s157 = scalar_select %p156, %s14, 1
      %s158 = smul.addr %s157, 2
      %s159 = smul.addr %s158, 4
      %s160 = scalar_lea.vmem %s3, %s159
      %p161 = scmp.lt.s32.totalorder %s14, 1
      %s162 = scalar_select %p161, %s14, 1
      %s163 = smul.addr %s162, 16
      %s164 = smul.addr %s163, 4
      %s165 = scalar_lea.vmem %s0, %s164
      %p166 = scmp.lt.s32.totalorder %s14, 1
      %s167 = scalar_select %p166, %s14, 1
      %s168 = smul.addr %s167, 2
      %s169 = smul.addr %s168, 4
      %s170 = scalar_lea.vmem %s3, %s169
      %v172 = vld [vmem:[%s1] sm:$0xf]
      %v173 = vld [vmem:[%s1 + $0x4] sm:$0xf]
      %v174 = vld [vmem:[%s1 + $0x8] sm:$0xf]
      %v175 = vld [vmem:[%s1 + $0xc] sm:$0xf]
      %v176 = vld [vmem:[%s1 + $0x10] sm:$0xf]
      %v177 = vld [vmem:[%s1 + $0x14] sm:$0xf]
      %v178 = vld [vmem:[%s1 + $0x18] sm:$0xf]
      %v179 = vld [vmem:[%s1 + $0x1c] sm:$0xf]
      %v180 = vld [vmem:[%s1 + $0x20] sm:$0xf]
      %v181 = vld [vmem:[%s1 + $0x24] sm:$0xf]
      %v182 = vld [vmem:[%s1 + $0x28] sm:$0xf]
      %v183 = vld [vmem:[%s1 + $0x2c] sm:$0xf]
      %v184 = vld [vmem:[%s1 + $0x30] sm:$0xf]
      %v185 = vld [vmem:[%s1 + $0x34] sm:$0xf]
      %v186 = vld [vmem:[%s1 + $0x38] sm:$0xf]
      %v187 = vld [vmem:[%s1 + $0x3c] sm:$0xf]
      %v188 = vld [vmem:[%s1 + $0x40] sm:$0xf]
      %v189 = vld [vmem:[%s1 + $0x44] sm:$0xf]
      %v190 = vld [vmem:[%s1 + $0x48] sm:$0xf]
      %v191 = vld [vmem:[%s1 + $0x4c] sm:$0xf]
      %v192 = vld [vmem:[%s1 + $0x50] sm:$0xf]
      %v193 = vld [vmem:[%s1 + $0x54] sm:$0xf]
      %v194 = vld [vmem:[%s1 + $0x58] sm:$0xf]
      %v195 = vld [vmem:[%s1 + $0x5c] sm:$0xf]
      %v196 = vld [vmem:[%s1 + $0x60] sm:$0xf]
      %v197 = vld [vmem:[%s1 + $0x64] sm:$0xf]
      %v198 = vld [vmem:[%s1 + $0x68] sm:$0xf]
      %v199 = vld [vmem:[%s1 + $0x6c] sm:$0xf]
      %v200 = vld [vmem:[%s1 + $0x70] sm:$0xf]
      %v201 = vld [vmem:[%s1 + $0x74] sm:$0xf]
      %v202 = vld [vmem:[%s1 + $0x78] sm:$0xf]
      %v203 = vld [vmem:[%s1 + $0x7c] sm:$0xf]
      %v204 = vld [vmem:[%s165] sm:$0xff]
      %v205 = vld [vmem:[%s165 + $0x8] sm:$0xff]
      %v208 = vunpack.c.l.b16 %v204
      %v209 = vunpack.c.h.b16 %v204
      %v210 = vunpack.c.l.b16 %v205
      %v211 = vunpack.c.h.b16 %v205
      %v212 = vpack.c.b16 %v210, %v208
      %v213 = vpack.c.b16 %v211, %v209
      %v248 = vunpack.c.l.b16 %v172
      %v249 = vunpack.c.l.b16 %v173
      %v250 = vunpack.c.l.b16 %v174
      %v251 = vunpack.c.l.b16 %v175
      %v252 = vunpack.c.l.b16 %v176
      %v253 = vunpack.c.l.b16 %v177
      %v254 = vunpack.c.l.b16 %v178
      %v255 = vunpack.c.l.b16 %v179
      %v256 = vunpack.c.l.b16 %v180
      %v257 = vunpack.c.l.b16 %v181
      %v258 = vunpack.c.l.b16 %v182
      %v259 = vunpack.c.l.b16 %v183
      %v260 = vunpack.c.l.b16 %v184
      %v261 = vunpack.c.l.b16 %v185
      %v262 = vunpack.c.l.b16 %v186
      %v263 = vunpack.c.l.b16 %v187
      %v264 = vunpack.c.l.b16 %v188
      %v265 = vunpack.c.l.b16 %v189
      %v266 = vunpack.c.l.b16 %v190
      %v267 = vunpack.c.l.b16 %v191
      %v268 = vunpack.c.l.b16 %v192
      %v269 = vunpack.c.l.b16 %v193
      %v270 = vunpack.c.l.b16 %v194
      %v271 = vunpack.c.l.b16 %v195
      %v272 = vunpack.c.l.b16 %v196
      %v273 = vunpack.c.l.b16 %v197
      %v274 = vunpack.c.l.b16 %v198
      %v275 = vunpack.c.l.b16 %v199
      %v276 = vunpack.c.l.b16 %v200
      %v277 = vunpack.c.l.b16 %v201
      %v278 = vunpack.c.l.b16 %v202
      %v279 = vunpack.c.l.b16 %v203
      %v280 = vpack.c.b16 %v249, %v248
      %v281 = vpack.c.b16 %v251, %v250
      %v282 = vpack.c.b16 %v253, %v252
      %v283 = vpack.c.b16 %v255, %v254
      %v284 = vpack.c.b16 %v257, %v256
      %v285 = vpack.c.b16 %v259, %v258
      %v286 = vpack.c.b16 %v261, %v260
      %v287 = vpack.c.b16 %v263, %v262
      %v288 = vpack.c.b16 %v265, %v264
      %v289 = vpack.c.b16 %v267, %v266
      %v290 = vpack.c.b16 %v269, %v268
      %v291 = vpack.c.b16 %v271, %v270
      %v292 = vpack.c.b16 %v273, %v272
      %v293 = vpack.c.b16 %v275, %v274
      %v294 = vpack.c.b16 %v277, %v276
      %v295 = vpack.c.b16 %v279, %v278
      %312 = vmatprep.subr.bf16.mxu0 0
      %313 = vmatpush1.bf16.msra.mxu0 %v287
      %314 = vmatprep.subr.bf16.mxu0 0
      %315 = vmatpush1.bf16.msra.mxu0 %v286
      %316 = vmatprep.subr.bf16.mxu0 0
      %317 = vmatpush1.bf16.msra.mxu0 %v285
      %318 = vmatprep.subr.bf16.mxu0 0
      %319 = vmatpush1.bf16.msra.mxu0 %v284
      %320 = vmatprep.subr.bf16.mxu0 0
      %321 = vmatpush1.bf16.msra.mxu0 %v283
      %322 = vmatprep.subr.bf16.mxu0 0
      %323 = vmatpush1.bf16.msra.mxu0 %v282
      %324 = vmatprep.subr.bf16.mxu0 0
      %325 = vmatpush1.bf16.msra.mxu0 %v281
      %326 = vmatprep.subr.bf16.mxu0 0
      %327 = vmatpush1.bf16.msra.mxu0 %v280
      %328 = vmatprep.subr.bf16.mxu0 0
      %329 = vmatpush2.bf16.msra.mxu0 %v295
      %330 = vmatprep.subr.bf16.mxu0 0
      %331 = vmatpush2.bf16.msra.mxu0 %v294
      %332 = vmatprep.subr.bf16.mxu0 0
      %333 = vmatpush2.bf16.msra.mxu0 %v293
      %334 = vmatprep.subr.bf16.mxu0 0
      %335 = vmatpush2.bf16.msra.mxu0 %v292
      %336 = vmatprep.subr.bf16.mxu0 0
      %337 = vmatpush2.bf16.msra.mxu0 %v291
      %338 = vmatprep.subr.bf16.mxu0 0
      %339 = vmatpush2.bf16.msra.mxu0 %v290
      %340 = vmatprep.subr.bf16.mxu0 0
      %341 = vmatpush2.bf16.msra.mxu0 %v289
      %342 = vmatprep.subr.bf16.mxu0 0
      %343 = vmatpush2.bf16.msra.mxu0 %v288
      %344 = vmatprep.mubr.bf16.mxu0 %v213
      %345 = vmatmul.mubr.bf16.gmra.mxu0 %v212
      %v346 = vpop.f32.mrf.mxu0
      %v347 = vadd.f32 0.0, %v346
      %v348 = vpop.f32.mrf.mxu0
      %v349 = vpop.f32.mrf.mxu0
      %v350 = vadd.f32 0.0, %v349
      %v351 = vpop.f32.mrf.mxu0
      %352 = vdwg.mxu0
      %s353 = scalar_lea.vmem %s165, 16
      %v354 = vld [vmem:[%s353] sm:$0xff]
      %v355 = vld [vmem:[%s353 + $0x8] sm:$0xff]
      %v358 = vunpack.c.l.b16 %v354
      %v359 = vunpack.c.h.b16 %v354
      %v360 = vunpack.c.l.b16 %v355
      %v361 = vunpack.c.h.b16 %v355
      %v362 = vpack.c.b16 %v360, %v358
      %v363 = vpack.c.b16 %v361, %v359
      %366 = vmatprep.subr.bf16.mxu0 0
      %367 = vmatpush1.bf16.msra.mxu0 %v287
      %368 = vmatprep.subr.bf16.mxu0 0
      %369 = vmatpush1.bf16.msra.mxu0 %v286
      %370 = vmatprep.subr.bf16.mxu0 0
      %371 = vmatpush1.bf16.msra.mxu0 %v285
      %372 = vmatprep.subr.bf16.mxu0 0
      %373 = vmatpush1.bf16.msra.mxu0 %v284
      %374 = vmatprep.subr.bf16.mxu0 0
      %375 = vmatpush1.bf16.msra.mxu0 %v283
      %376 = vmatprep.subr.bf16.mxu0 0
      %377 = vmatpush1.bf16.msra.mxu0 %v282
      %378 = vmatprep.subr.bf16.mxu0 0
      %379 = vmatpush1.bf16.msra.mxu0 %v281
      %380 = vmatprep.subr.bf16.mxu0 0
      %381 = vmatpush1.bf16.msra.mxu0 %v280
      %382 = vmatprep.subr.bf16.mxu0 0
      %383 = vmatpush2.bf16.msra.mxu0 %v295
      %384 = vmatprep.subr.bf16.mxu0 0
      %385 = vmatpush2.bf16.msra.mxu0 %v294
      %386 = vmatprep.subr.bf16.mxu0 0
      %387 = vmatpush2.bf16.msra.mxu0 %v293
      %388 = vmatprep.subr.bf16.mxu0 0
      %389 = vmatpush2.bf16.msra.mxu0 %v292
      %390 = vmatprep.subr.bf16.mxu0 0
      %391 = vmatpush2.bf16.msra.mxu0 %v291
      %392 = vmatprep.subr.bf16.mxu0 0
      %393 = vmatpush2.bf16.msra.mxu0 %v290
      %394 = vmatprep.subr.bf16.mxu0 0
      %395 = vmatpush2.bf16.msra.mxu0 %v289
      %396 = vmatprep.subr.bf16.mxu0 0
      %397 = vmatpush2.bf16.msra.mxu0 %v288
      %398 = vmatprep.mubr.bf16.mxu0 %v363
      %399 = vmatmul.mubr.bf16.gmra.mxu0 %v362
      %v400 = vpop.f32.mrf.mxu0
      %v401 = vadd.f32 0.0, %v400
      %v402 = vpop.f32.mrf.mxu0
      %v403 = vpop.f32.mrf.mxu0
      %v404 = vadd.f32 0.0, %v403
      %v405 = vpop.f32.mrf.mxu0
      %406 = vdwg.mxu0
      %s407 = scalar_lea.vmem %s165, 32
      %v408 = vld [vmem:[%s407] sm:$0xff]
      %v409 = vld [vmem:[%s407 + $0x8] sm:$0xff]
      %v412 = vunpack.c.l.b16 %v408
      %v413 = vunpack.c.h.b16 %v408
      %v414 = vunpack.c.l.b16 %v409
      %v415 = vunpack.c.h.b16 %v409
      %v416 = vpack.c.b16 %v414, %v412
      %v417 = vpack.c.b16 %v415, %v413
      %420 = vmatprep.subr.bf16.mxu0 0
      %421 = vmatpush1.bf16.msra.mxu0 %v287
      %422 = vmatprep.subr.bf16.mxu0 0
      %423 = vmatpush1.bf16.msra.mxu0 %v286
      %424 = vmatprep.subr.bf16.mxu0 0
      %425 = vmatpush1.bf16.msra.mxu0 %v285
      %426 = vmatprep.subr.bf16.mxu0 0
      %427 = vmatpush1.bf16.msra.mxu0 %v284
      %428 = vmatprep.subr.bf16.mxu0 0
      %429 = vmatpush1.bf16.msra.mxu0 %v283
      %430 = vmatprep.subr.bf16.mxu0 0
      %431 = vmatpush1.bf16.msra.mxu0 %v282
      %432 = vmatprep.subr.bf16.mxu0 0
      %433 = vmatpush1.bf16.msra.mxu0 %v281
      %434 = vmatprep.subr.bf16.mxu0 0
      %435 = vmatpush1.bf16.msra.mxu0 %v280
      %436 = vmatprep.subr.bf16.mxu0 0
      %437 = vmatpush2.bf16.msra.mxu0 %v295
      %438 = vmatprep.subr.bf16.mxu0 0
      %439 = vmatpush2.bf16.msra.mxu0 %v294
      %440 = vmatprep.subr.bf16.mxu0 0
      %441 = vmatpush2.bf16.msra.mxu0 %v293
      %442 = vmatprep.subr.bf16.mxu0 0
      %443 = vmatpush2.bf16.msra.mxu0 %v292
      %444 = vmatprep.subr.bf16.mxu0 0
      %445 = vmatpush2.bf16.msra.mxu0 %v291
      %446 = vmatprep.subr.bf16.mxu0 0
      %447 = vmatpush2.bf16.msra.mxu0 %v290
      %448 = vmatprep.subr.bf16.mxu0 0
      %449 = vmatpush2.bf16.msra.mxu0 %v289
      %450 = vmatprep.subr.bf16.mxu0 0
      %451 = vmatpush2.bf16.msra.mxu0 %v288
      %452 = vmatprep.mubr.bf16.mxu0 %v417
      %453 = vmatmul.mubr.bf16.gmra.mxu0 %v416
      %v454 = vpop.f32.mrf.mxu0
      %v455 = vadd.f32 0.0, %v454
      %v456 = vpop.f32.mrf.mxu0
      %v457 = vpop.f32.mrf.mxu0
      %v458 = vadd.f32 0.0, %v457
      %v459 = vpop.f32.mrf.mxu0
      %460 = vdwg.mxu0
      %s461 = scalar_lea.vmem %s165, 48
      %v462 = vld [vmem:[%s461] sm:$0xff]
      %v463 = vld [vmem:[%s461 + $0x8] sm:$0xff]
      %v466 = vunpack.c.l.b16 %v462
      %v467 = vunpack.c.h.b16 %v462
      %v468 = vunpack.c.l.b16 %v463
      %v469 = vunpack.c.h.b16 %v463
      %v470 = vpack.c.b16 %v468, %v466
      %v471 = vpack.c.b16 %v469, %v467
      %474 = vmatprep.subr.bf16.mxu0 0
      %475 = vmatpush1.bf16.msra.mxu0 %v287
      %476 = vmatprep.subr.bf16.mxu0 0
      %477 = vmatpush1.bf16.msra.mxu0 %v286
      %478 = vmatprep.subr.bf16.mxu0 0
      %479 = vmatpush1.bf16.msra.mxu0 %v285
      %480 = vmatprep.subr.bf16.mxu0 0
      %481 = vmatpush1.bf16.msra.mxu0 %v284
      %482 = vmatprep.subr.bf16.mxu0 0
      %483 = vmatpush1.bf16.msra.mxu0 %v283
      %484 = vmatprep.subr.bf16.mxu0 0
      %485 = vmatpush1.bf16.msra.mxu0 %v282
      %486 = vmatprep.subr.bf16.mxu0 0
      %487 = vmatpush1.bf16.msra.mxu0 %v281
      %488 = vmatprep.subr.bf16.mxu0 0
      %489 = vmatpush1.bf16.msra.mxu0 %v280
      %490 = vmatprep.subr.bf16.mxu0 0
      %491 = vmatpush2.bf16.msra.mxu0 %v295
      %492 = vmatprep.subr.bf16.mxu0 0
      %493 = vmatpush2.bf16.msra.mxu0 %v294
      %494 = vmatprep.subr.bf16.mxu0 0
      %495 = vmatpush2.bf16.msra.mxu0 %v293
      %496 = vmatprep.subr.bf16.mxu0 0
      %497 = vmatpush2.bf16.msra.mxu0 %v292
      %498 = vmatprep.subr.bf16.mxu0 0
      %499 = vmatpush2.bf16.msra.mxu0 %v291
      %500 = vmatprep.subr.bf16.mxu0 0
      %501 = vmatpush2.bf16.msra.mxu0 %v290
      %502 = vmatprep.subr.bf16.mxu0 0
      %503 = vmatpush2.bf16.msra.mxu0 %v289
      %504 = vmatprep.subr.bf16.mxu0 0
      %505 = vmatpush2.bf16.msra.mxu0 %v288
      %506 = vmatprep.mubr.bf16.mxu0 %v471
      %507 = vmatmul.mubr.bf16.gmra.mxu0 %v470
      %v508 = vpop.f32.mrf.mxu0
      %v509 = vadd.f32 0.0, %v508
      %v510 = vpop.f32.mrf.mxu0
      %v511 = vpop.f32.mrf.mxu0
      %v512 = vadd.f32 0.0, %v511
      %v513 = vpop.f32.mrf.mxu0
      %514 = vdwg.mxu0
      %v515 = vmax.f32 %v347, %v401
      %v516 = vmax.f32 %v350, %v404
      %v517 = vmax.f32 %v455, %v509
      %v518 = vmax.f32 %v458, %v512
      %v519 = vmax.f32 %v515, %v517
      %v520 = vmax.f32 %v516, %v518
      %v521 = vld [vmem:[%s2] sm:$0x1]
      %v523 = vlaneseq
      %v524 = vshrl.u32 %v523, 7
      %v525 = vsub.s32 0, %v524
      %v526 = vrot.slane %v521, %v525
      %v528 = vadd.f32 %v519, %v526
      %v529 = vadd.f32 %v520, %v526
      %v530 = vmax.f32 %v528, 0.0
      %v531 = vmax.f32 %v529, 0.0
      %v532 = vpack.c.bf16 %v531, %v530
      %v534 = vunpack.c.l.b16 %v532
      %v535 = vunpack.c.h.b16 %v532
      %v536 = vpack.c.b16 %v534, %v534
      %v537 = vpack.c.b16 %v535, %v535
      %540 = vst [vmem:[%s170] sm:$0xf] %v536
      %541 = vst [vmem:[%s170 + $0x4] sm:$0xf] %v537
      %p542 = scmp.lt.s32.totalorder %s14, 1
      %s543 = scalar_select %p542, %s14, 1
      %s544 = smul.addr %s543, 2
      %s545 = smul.addr %s544, 4
      %s546 = scalar_lea.vmem %s3, %s545
      // Predicated region
      $region33: #{simple_cnn_forward.4} parent=31 // pred_check
        %p547 = pneg %p100
      $region34: #{simple_cnn_forward.4} parent=31 // pred_check_branch
        %549 = sbr.rel (%p547) target = $region36
      $region35: #{simple_cnn_forward.4} parent=31 // pred_region
        _
      $region36: #{simple_cnn_forward.4} parent=31 // pred_fallthru
        _
    $region32: #{simple_cnn_forward.4} parent=5 // pred_fallthru
      _
    %p550 = scmp.le.s32.totalorder 2, %s9
    // Predicated region
    $region37: #{simple_cnn_forward.4} parent=5 // pred_check
      %p551 = pneg %p550
    $region38: #{simple_cnn_forward.4} parent=5 // pred_check_branch
      %553 = sbr.rel (%p551) target = $region40
    $region39: #{simple_cnn_forward.4} parent=5 // pred_region
      %s554 = ssub.s32 %s9, 2
      // Predicated region
      $region41: #{simple_cnn_forward.4} parent=39 // pred_check
        %p555 = pneg %p106
      $region42: #{simple_cnn_forward.4} parent=39 // pred_check_branch
        %557 = sbr.rel (%p555) target = $region44
      $region43: #{simple_cnn_forward.4} parent=39 // pred_region
        %p558 = scmp.lt.s32.totalorder %s15, 1
        %s559 = scalar_select %p558, %s15, 1
        %s560 = smul.addr %s559, 2
        %s561 = smul.addr %s560, 4
        %s562 = scalar_lea.vmem %s3, %s561
      $region44: #{simple_cnn_forward.4} parent=39 // pred_fallthru
        _
    $region40: #{simple_cnn_forward.4} parent=5 // pred_fallthru
      _
  $region6: #{simple_cnn_forward.4} parent=0 // loop_footer
    %s13 = sadd.s32 1, %s9
  $region7: #{simple_cnn_forward.4} parent=0 // loop_footer_branch
    %8 = sbr.rel target = $region3
  $region8: #{simple_cnn_forward.4} parent=0 // loop_exit
    _

// kernel: simple_cnn_forward.5
$region0: #{simple_cnn_forward.5}
  #allocation0 [shape = 'u32[]', space=smem, size = 0x4, offset = 0x4, fixed_abs, tag = 'smem constant byte address 0x4 - core index']
  #allocation1 [shape = 'u32[144,128]{1,0:T(1,128)}', space=vmem, size = 0x12000, scoped, tag = 'internal scratch']
  %s0 = inlined_call_operand.vmem [shape: bf16[2,2048], index: 0, kind: input, shape index: {}]
  %s1 = inlined_call_operand.vmem [shape: bf16[2048,128], index: 1, kind: input, shape index: {}]
  %s2 = inlined_call_operand.vmem [shape: f32[1,128], index: 2, kind: input, shape index: {}]
  %s3 = inlined_call_operand.vmem [shape: bf16[128,128], index: 3, kind: input, shape index: {}]
  %s4 = inlined_call_operand.vmem [shape: f32[1,128], index: 4, kind: input, shape index: {}]
  %s5 = inlined_call_operand.hbm [shape: f32[2,128], index: 5, kind: output, shape index: {}]
  %s6 = sld [smem:[#allocation0]]
  $region30: #{simple_cnn_forward.5} parent=0
    _
  %s8 = ssub.s32 1, %s6
  %s9 = scalar_select 0, %s8, %s6
  $region1: #{simple_cnn_forward.5} parent=0
    #allocation2 [shape = 'u8[1024]{0}', space=vmem, size = 0x400, scoped, tag = 'output window, operand 0, single buffered']
    #allocation3 [shape = 's32[1]{0}', space=sflag, size = 0x4, scoped, tag = 'scoped memory for simple_cnn_forward.5']
    %10 = vsyncpa [#allocation3], 0
    // Predicated region
    $region2: #{simple_cnn_forward.5} parent=1 // pred_check
      _
    $region3: #{simple_cnn_forward.5} parent=1 // pred_check_branch
      %12 = sbr.rel (0) target = $region5
    $region4: #{simple_cnn_forward.5} parent=1 // pred_region
      _
    $region5: #{simple_cnn_forward.5} parent=1 // pred_fallthru
      _
    // Predicated region
    $region6: #{simple_cnn_forward.5} parent=1 // pred_check
      _
    $region7: #{simple_cnn_forward.5} parent=1 // pred_check_branch
      %14 = sbr.rel (0) target = $region9
    $region8: #{simple_cnn_forward.5} parent=1 // pred_region
      _
    $region9: #{simple_cnn_forward.5} parent=1 // pred_fallthru
      _
    // Predicated region
    $region10: #{simple_cnn_forward.5} parent=1 // pred_check
      _
    $region11: #{simple_cnn_forward.5} parent=1 // pred_check_branch
      %16 = sbr.rel (0) target = $region13
    $region12: #{simple_cnn_forward.5} parent=1 // pred_region
      _
    $region13: #{simple_cnn_forward.5} parent=1 // pred_fallthru
      _
    // Predicated region
    $region14: #{simple_cnn_forward.5} parent=1 // pred_check
      _
    $region15: #{simple_cnn_forward.5} parent=1 // pred_check_branch
      %18 = sbr.rel (0) target = $region17
    $region16: #{simple_cnn_forward.5} parent=1 // pred_region
      _
    $region17: #{simple_cnn_forward.5} parent=1 // pred_fallthru
      _
    // Predicated region
    $region18: #{simple_cnn_forward.5} parent=1 // pred_check
      _
    $region19: #{simple_cnn_forward.5} parent=1 // pred_check_branch
      %20 = sbr.rel (0) target = $region21
    $region20: #{simple_cnn_forward.5} parent=1 // pred_region
      _
    $region21: #{simple_cnn_forward.5} parent=1 // pred_fallthru
      _
    %v22 = vld [vmem:[%s0] sm:$0xff]
    %v23 = vld [vmem:[%s0 + $0x8] sm:$0xff]
    %v24 = vld [vmem:[%s1] sm:$0xf]
    %v25 = vld [vmem:[%s1 + $0x4] sm:$0xf]
    %v26 = vld [vmem:[%s1 + $0x8] sm:$0xf]
    %v27 = vld [vmem:[%s1 + $0xc] sm:$0xf]
    %v28 = vld [vmem:[%s1 + $0x10] sm:$0xf]
    %v29 = vld [vmem:[%s1 + $0x14] sm:$0xf]
    %v30 = vld [vmem:[%s1 + $0x18] sm:$0xf]
    %v31 = vld [vmem:[%s1 + $0x1c] sm:$0xf]
    %v32 = vld [vmem:[%s1 + $0x20] sm:$0xf]
    %v33 = vld [vmem:[%s1 + $0x24] sm:$0xf]
    %v34 = vld [vmem:[%s1 + $0x28] sm:$0xf]
    %v35 = vld [vmem:[%s1 + $0x2c] sm:$0xf]
    %v36 = vld [vmem:[%s1 + $0x30] sm:$0xf]
    %v37 = vld [vmem:[%s1 + $0x34] sm:$0xf]
    %v38 = vld [vmem:[%s1 + $0x38] sm:$0xf]
    %v39 = vld [vmem:[%s1 + $0x3c] sm:$0xf]
    %v40 = vld [vmem:[%s1 + $0x40] sm:$0xf]
    %v41 = vld [vmem:[%s1 + $0x44] sm:$0xf]
    %v42 = vld [vmem:[%s1 + $0x48] sm:$0xf]
    %v43 = vld [vmem:[%s1 + $0x4c] sm:$0xf]
    %v44 = vld [vmem:[%s1 + $0x50] sm:$0xf]
    %v45 = vld [vmem:[%s1 + $0x54] sm:$0xf]
    %v46 = vld [vmem:[%s1 + $0x58] sm:$0xf]
    %v47 = vld [vmem:[%s1 + $0x5c] sm:$0xf]
    %v48 = vld [vmem:[%s1 + $0x60] sm:$0xf]
    %v49 = vld [vmem:[%s1 + $0x64] sm:$0xf]
    %v50 = vld [vmem:[%s1 + $0x68] sm:$0xf]
    %v51 = vld [vmem:[%s1 + $0x6c] sm:$0xf]
    %v52 = vld [vmem:[%s1 + $0x70] sm:$0xf]
    %v53 = vld [vmem:[%s1 + $0x74] sm:$0xf]
    %v54 = vld [vmem:[%s1 + $0x78] sm:$0xf]
    %v55 = vld [vmem:[%s1 + $0x7c] sm:$0xf]
    %v56 = vld [vmem:[%s1 + $0x80] sm:$0xf]
    %v57 = vld [vmem:[%s1 + $0x84] sm:$0xf]
    %v58 = vld [vmem:[%s1 + $0x88] sm:$0xf]
    %v59 = vld [vmem:[%s1 + $0x8c] sm:$0xf]
    %v60 = vld [vmem:[%s1 + $0x90] sm:$0xf]
    %v61 = vld [vmem:[%s1 + $0x94] sm:$0xf]
    %v62 = vld [vmem:[%s1 + $0x98] sm:$0xf]
    %v63 = vld [vmem:[%s1 + $0x9c] sm:$0xf]
    %v64 = vld [vmem:[%s1 + $0xa0] sm:$0xf]
    %v65 = vld [vmem:[%s1 + $0xa4] sm:$0xf]
    %v66 = vld [vmem:[%s1 + $0xa8] sm:$0xf]
    %v67 = vld [vmem:[%s1 + $0xac] sm:$0xf]
    %v68 = vld [vmem:[%s1 + $0xb0] sm:$0xf]
    %v69 = vld [vmem:[%s1 + $0xb4] sm:$0xf]
    %v70 = vld [vmem:[%s1 + $0xb8] sm:$0xf]
    %v71 = vld [vmem:[%s1 + $0xbc] sm:$0xf]
    %v72 = vld [vmem:[%s1 + $0xc0] sm:$0xf]
    %v73 = vld [vmem:[%s1 + $0xc4] sm:$0xf]
    %v74 = vld [vmem:[%s1 + $0xc8] sm:$0xf]
    %v75 = vld [vmem:[%s1 + $0xcc] sm:$0xf]
    %v76 = vld [vmem:[%s1 + $0xd0] sm:$0xf]
    %v77 = vld [vmem:[%s1 + $0xd4] sm:$0xf]
    %v78 = vld [vmem:[%s1 + $0xd8] sm:$0xf]
    %v79 = vld [vmem:[%s1 + $0xdc] sm:$0xf]
    %v80 = vld [vmem:[%s1 + $0xe0] sm:$0xf]
    %v81 = vld [vmem:[%s1 + $0xe4] sm:$0xf]
    %v82 = vld [vmem:[%s1 + $0xe8] sm:$0xf]
    %v83 = vld [vmem:[%s1 + $0xec] sm:$0xf]
    %v84 = vld [vmem:[%s1 + $0xf0] sm:$0xf]
    %v85 = vld [vmem:[%s1 + $0xf4] sm:$0xf]
    %v86 = vld [vmem:[%s1 + $0xf8] sm:$0xf]
    %v87 = vld [vmem:[%s1 + $0xfc] sm:$0xf]
    %v88 = vld [vmem:[%s1 + $0x100] sm:$0xf]
    %v89 = vld [vmem:[%s1 + $0x104] sm:$0xf]
    %v90 = vld [vmem:[%s1 + $0x108] sm:$0xf]
    %v91 = vld [vmem:[%s1 + $0x10c] sm:$0xf]
    %v92 = vld [vmem:[%s1 + $0x110] sm:$0xf]
    %v93 = vld [vmem:[%s1 + $0x114] sm:$0xf]
    %v94 = vld [vmem:[%s1 + $0x118] sm:$0xf]
    %v95 = vld [vmem:[%s1 + $0x11c] sm:$0xf]
    %v96 = vld [vmem:[%s1 + $0x120] sm:$0xf]
    %v97 = vld [vmem:[%s1 + $0x124] sm:$0xf]
    %v98 = vld [vmem:[%s1 + $0x128] sm:$0xf]
    %v99 = vld [vmem:[%s1 + $0x12c] sm:$0xf]
    %v100 = vld [vmem:[%s1 + $0x130] sm:$0xf]
    %v101 = vld [vmem:[%s1 + $0x134] sm:$0xf]
    %v102 = vld [vmem:[%s1 + $0x138] sm:$0xf]
    %v103 = vld [vmem:[%s1 + $0x13c] sm:$0xf]
    %v104 = vld [vmem:[%s1 + $0x140] sm:$0xf]
    %v105 = vld [vmem:[%s1 + $0x144] sm:$0xf]
    %v106 = vld [vmem:[%s1 + $0x148] sm:$0xf]
    %v107 = vld [vmem:[%s1 + $0x14c] sm:$0xf]
    %v108 = vld [vmem:[%s1 + $0x150] sm:$0xf]
    %v109 = vld [vmem:[%s1 + $0x154] sm:$0xf]
    %v110 = vld [vmem:[%s1 + $0x158] sm:$0xf]
    %v111 = vld [vmem:[%s1 + $0x15c] sm:$0xf]
    %v112 = vld [vmem:[%s1 + $0x160] sm:$0xf]
    %v113 = vld [vmem:[%s1 + $0x164] sm:$0xf]
    %v114 = vld [vmem:[%s1 + $0x168] sm:$0xf]
    %v115 = vld [vmem:[%s1 + $0x16c] sm:$0xf]
    %v116 = vld [vmem:[%s1 + $0x170] sm:$0xf]
    %v117 = vld [vmem:[%s1 + $0x174] sm:$0xf]
    %v118 = vld [vmem:[%s1 + $0x178] sm:$0xf]
    %v119 = vld [vmem:[%s1 + $0x17c] sm:$0xf]
    %v120 = vld [vmem:[%s1 + $0x180] sm:$0xf]
    %v121 = vld [vmem:[%s1 + $0x184] sm:$0xf]
    %v122 = vld [vmem:[%s1 + $0x188] sm:$0xf]
    %v123 = vld [vmem:[%s1 + $0x18c] sm:$0xf]
    %v124 = vld [vmem:[%s1 + $0x190] sm:$0xf]
    %v125 = vld [vmem:[%s1 + $0x194] sm:$0xf]
    %v126 = vld [vmem:[%s1 + $0x198] sm:$0xf]
    %v127 = vld [vmem:[%s1 + $0x19c] sm:$0xf]
    %v128 = vld [vmem:[%s1 + $0x1a0] sm:$0xf]
    %v129 = vld [vmem:[%s1 + $0x1a4] sm:$0xf]
    %v130 = vld [vmem:[%s1 + $0x1a8] sm:$0xf]
    %v131 = vld [vmem:[%s1 + $0x1ac] sm:$0xf]
    %v132 = vld [vmem:[%s1 + $0x1b0] sm:$0xf]
    %v133 = vld [vmem:[%s1 + $0x1b4] sm:$0xf]
    %v134 = vld [vmem:[%s1 + $0x1b8] sm:$0xf]
    %v135 = vld [vmem:[%s1 + $0x1bc] sm:$0xf]
    %v136 = vld [vmem:[%s1 + $0x1c0] sm:$0xf]
    %v137 = vld [vmem:[%s1 + $0x1c4] sm:$0xf]
    %v138 = vld [vmem:[%s1 + $0x1c8] sm:$0xf]
    %v139 = vld [vmem:[%s1 + $0x1cc] sm:$0xf]
    %v140 = vld [vmem:[%s1 + $0x1d0] sm:$0xf]
    %v141 = vld [vmem:[%s1 + $0x1d4] sm:$0xf]
    %v142 = vld [vmem:[%s1 + $0x1d8] sm:$0xf]
    %v143 = vld [vmem:[%s1 + $0x1dc] sm:$0xf]
    %v144 = vld [vmem:[%s1 + $0x1e0] sm:$0xf]
    %v145 = vld [vmem:[%s1 + $0x1e4] sm:$0xf]
    %v146 = vld [vmem:[%s1 + $0x1e8] sm:$0xf]
    %v147 = vld [vmem:[%s1 + $0x1ec] sm:$0xf]
    %v148 = vld [vmem:[%s1 + $0x1f0] sm:$0xf]
    %v149 = vld [vmem:[%s1 + $0x1f4] sm:$0xf]
    %v150 = vld [vmem:[%s1 + $0x1f8] sm:$0xf]
    %v151 = vld [vmem:[%s1 + $0x1fc] sm:$0xf]
    %v152 = vld [vmem:[%s1 + $0x200] sm:$0xf]
    %v153 = vld [vmem:[%s1 + $0x204] sm:$0xf]
    %v154 = vld [vmem:[%s1 + $0x208] sm:$0xf]
    %v155 = vld [vmem:[%s1 + $0x20c] sm:$0xf]
    %v156 = vld [vmem:[%s1 + $0x210] sm:$0xf]
    %v157 = vld [vmem:[%s1 + $0x214] sm:$0xf]
    %v158 = vld [vmem:[%s1 + $0x218] sm:$0xf]
    %v159 = vld [vmem:[%s1 + $0x21c] sm:$0xf]
    %v160 = vld [vmem:[%s1 + $0x220] sm:$0xf]
    %v161 = vld [vmem:[%s1 + $0x224] sm:$0xf]
    %v162 = vld [vmem:[%s1 + $0x228] sm:$0xf]
    %v163 = vld [vmem:[%s1 + $0x22c] sm:$0xf]
    %v164 = vld [vmem:[%s1 + $0x230] sm:$0xf]
    %v165 = vld [vmem:[%s1 + $0x234] sm:$0xf]
    %v166 = vld [vmem:[%s1 + $0x238] sm:$0xf]
    %v167 = vld [vmem:[%s1 + $0x23c] sm:$0xf]
    %v168 = vld [vmem:[%s1 + $0x240] sm:$0xf]
    %v169 = vld [vmem:[%s1 + $0x244] sm:$0xf]
    %v170 = vld [vmem:[%s1 + $0x248] sm:$0xf]
    %v171 = vld [vmem:[%s1 + $0x24c] sm:$0xf]
    %v172 = vld [vmem:[%s1 + $0x250] sm:$0xf]
    %v173 = vld [vmem:[%s1 + $0x254] sm:$0xf]
    %v174 = vld [vmem:[%s1 + $0x258] sm:$0xf]
    %v175 = vld [vmem:[%s1 + $0x25c] sm:$0xf]
    %v176 = vld [vmem:[%s1 + $0x260] sm:$0xf]
    %v177 = vld [vmem:[%s1 + $0x264] sm:$0xf]
    %v178 = vld [vmem:[%s1 + $0x268] sm:$0xf]
    %v179 = vld [vmem:[%s1 + $0x26c] sm:$0xf]
    %v180 = vld [vmem:[%s1 + $0x270] sm:$0xf]
    %v181 = vld [vmem:[%s1 + $0x274] sm:$0xf]
    %v182 = vld [vmem:[%s1 + $0x278] sm:$0xf]
    %v183 = vld [vmem:[%s1 + $0x27c] sm:$0xf]
    %v184 = vld [vmem:[%s1 + $0x280] sm:$0xf]
    %v185 = vld [vmem:[%s1 + $0x284] sm:$0xf]
    %v186 = vld [vmem:[%s1 + $0x288] sm:$0xf]
    %v187 = vld [vmem:[%s1 + $0x28c] sm:$0xf]
    %v188 = vld [vmem:[%s1 + $0x290] sm:$0xf]
    %v189 = vld [vmem:[%s1 + $0x294] sm:$0xf]
    %v190 = vld [vmem:[%s1 + $0x298] sm:$0xf]
    %v191 = vld [vmem:[%s1 + $0x29c] sm:$0xf]
    %v192 = vld [vmem:[%s1 + $0x2a0] sm:$0xf]
    %v193 = vld [vmem:[%s1 + $0x2a4] sm:$0xf]
    %v194 = vld [vmem:[%s1 + $0x2a8] sm:$0xf]
    %v195 = vld [vmem:[%s1 + $0x2ac] sm:$0xf]
    %v196 = vld [vmem:[%s1 + $0x2b0] sm:$0xf]
    %v197 = vld [vmem:[%s1 + $0x2b4] sm:$0xf]
    %v198 = vld [vmem:[%s1 + $0x2b8] sm:$0xf]
    %v199 = vld [vmem:[%s1 + $0x2bc] sm:$0xf]
    %v200 = vld [vmem:[%s1 + $0x2c0] sm:$0xf]
    %v201 = vld [vmem:[%s1 + $0x2c4] sm:$0xf]
    %v202 = vld [vmem:[%s1 + $0x2c8] sm:$0xf]
    %v203 = vld [vmem:[%s1 + $0x2cc] sm:$0xf]
    %v204 = vld [vmem:[%s1 + $0x2d0] sm:$0xf]
    %v205 = vld [vmem:[%s1 + $0x2d4] sm:$0xf]
    %v206 = vld [vmem:[%s1 + $0x2d8] sm:$0xf]
    %v207 = vld [vmem:[%s1 + $0x2dc] sm:$0xf]
    %v208 = vld [vmem:[%s1 + $0x2e0] sm:$0xf]
    %v209 = vld [vmem:[%s1 + $0x2e4] sm:$0xf]
    %v210 = vld [vmem:[%s1 + $0x2e8] sm:$0xf]
    %v211 = vld [vmem:[%s1 + $0x2ec] sm:$0xf]
    %v212 = vld [vmem:[%s1 + $0x2f0] sm:$0xf]
    %v213 = vld [vmem:[%s1 + $0x2f4] sm:$0xf]
    %v214 = vld [vmem:[%s1 + $0x2f8] sm:$0xf]
    %v215 = vld [vmem:[%s1 + $0x2fc] sm:$0xf]
    %v216 = vld [vmem:[%s1 + $0x300] sm:$0xf]
    %v217 = vld [vmem:[%s1 + $0x304] sm:$0xf]
    %v218 = vld [vmem:[%s1 + $0x308] sm:$0xf]
    %v219 = vld [vmem:[%s1 + $0x30c] sm:$0xf]
    %v220 = vld [vmem:[%s1 + $0x310] sm:$0xf]
    %v221 = vld [vmem:[%s1 + $0x314] sm:$0xf]
    %v222 = vld [vmem:[%s1 + $0x318] sm:$0xf]
    %v223 = vld [vmem:[%s1 + $0x31c] sm:$0xf]
    %v224 = vld [vmem:[%s1 + $0x320] sm:$0xf]
    %v225 = vld [vmem:[%s1 + $0x324] sm:$0xf]
    %v226 = vld [vmem:[%s1 + $0x328] sm:$0xf]
    %v227 = vld [vmem:[%s1 + $0x32c] sm:$0xf]
    %v228 = vld [vmem:[%s1 + $0x330] sm:$0xf]
    %v229 = vld [vmem:[%s1 + $0x334] sm:$0xf]
    %v230 = vld [vmem:[%s1 + $0x338] sm:$0xf]
    %v231 = vld [vmem:[%s1 + $0x33c] sm:$0xf]
    %v232 = vld [vmem:[%s1 + $0x340] sm:$0xf]
    %v233 = vld [vmem:[%s1 + $0x344] sm:$0xf]
    %v234 = vld [vmem:[%s1 + $0x348] sm:$0xf]
    %v235 = vld [vmem:[%s1 + $0x34c] sm:$0xf]
    %v236 = vld [vmem:[%s1 + $0x350] sm:$0xf]
    %v237 = vld [vmem:[%s1 + $0x354] sm:$0xf]
    %v238 = vld [vmem:[%s1 + $0x358] sm:$0xf]
    %v239 = vld [vmem:[%s1 + $0x35c] sm:$0xf]
    %v240 = vld [vmem:[%s1 + $0x360] sm:$0xf]
    %v241 = vld [vmem:[%s1 + $0x364] sm:$0xf]
    %v242 = vld [vmem:[%s1 + $0x368] sm:$0xf]
    %v243 = vld [vmem:[%s1 + $0x36c] sm:$0xf]
    %v244 = vld [vmem:[%s1 + $0x370] sm:$0xf]
    %v245 = vld [vmem:[%s1 + $0x374] sm:$0xf]
    %v246 = vld [vmem:[%s1 + $0x378] sm:$0xf]
    %v247 = vld [vmem:[%s1 + $0x37c] sm:$0xf]
    %v248 = vld [vmem:[%s1 + $0x380] sm:$0xf]
    %v249 = vld [vmem:[%s1 + $0x384] sm:$0xf]
    %v250 = vld [vmem:[%s1 + $0x388] sm:$0xf]
    %v251 = vld [vmem:[%s1 + $0x38c] sm:$0xf]
    %v252 = vld [vmem:[%s1 + $0x390] sm:$0xf]
    %v253 = vld [vmem:[%s1 + $0x394] sm:$0xf]
    %v254 = vld [vmem:[%s1 + $0x398] sm:$0xf]
    %v255 = vld [vmem:[%s1 + $0x39c] sm:$0xf]
    %v256 = vld [vmem:[%s1 + $0x3a0] sm:$0xf]
    %v257 = vld [vmem:[%s1 + $0x3a4] sm:$0xf]
    %v258 = vld [vmem:[%s1 + $0x3a8] sm:$0xf]
    %v259 = vld [vmem:[%s1 + $0x3ac] sm:$0xf]
    %v260 = vld [vmem:[%s1 + $0x3b0] sm:$0xf]
    %v261 = vld [vmem:[%s1 + $0x3b4] sm:$0xf]
    %v262 = vld [vmem:[%s1 + $0x3b8] sm:$0xf]
    %v263 = vld [vmem:[%s1 + $0x3bc] sm:$0xf]
    %v264 = vld [vmem:[%s1 + $0x3c0] sm:$0xf]
    %v265 = vld [vmem:[%s1 + $0x3c4] sm:$0xf]
    %v266 = vld [vmem:[%s1 + $0x3c8] sm:$0xf]
    %v267 = vld [vmem:[%s1 + $0x3cc] sm:$0xf]
    %v268 = vld [vmem:[%s1 + $0x3d0] sm:$0xf]
    %v269 = vld [vmem:[%s1 + $0x3d4] sm:$0xf]
    %v270 = vld [vmem:[%s1 + $0x3d8] sm:$0xf]
    %v271 = vld [vmem:[%s1 + $0x3dc] sm:$0xf]
    %v272 = vld [vmem:[%s1 + $0x3e0] sm:$0xf]
    %v273 = vld [vmem:[%s1 + $0x3e4] sm:$0xf]
    %v274 = vld [vmem:[%s1 + $0x3e8] sm:$0xf]
    %v275 = vld [vmem:[%s1 + $0x3ec] sm:$0xf]
    %v276 = vld [vmem:[%s1 + $0x3f0] sm:$0xf]
    %v277 = vld [vmem:[%s1 + $0x3f4] sm:$0xf]
    %v278 = vld [vmem:[%s1 + $0x3f8] sm:$0xf]
    %v279 = vld [vmem:[%s1 + $0x3fc] sm:$0xf]
    %v280 = vld [vmem:[%s2] sm:$0x1]
    %v282 = vlaneseq
    %v283 = vshrl.u32 %v282, 7
    %v284 = vsub.s32 0, %v283
    %v285 = vrot.slane %v280, %v284
    %v289 = vcombine.high %v22, %v22
    %v291 = vunpack.c.l.s4 1966171168
    %v292 = vunpack.c.0.s8 %v291
    %v293 = vlaneseq
    %v294 = vshrl.u32 %v293, 7
    %v295 = vsub.s32 %v292, %v294
    %v296 = vrot.slane %v22, %v295
    %v298 = vunpack.c.l.s4 1966171168
    %v299 = vunpack.c.0.s8 %v298
    %v300 = vlaneseq
    %v301 = vshrl.u32 %v300, 7
    %v302 = vsub.s32 %v299, %v301
    %v303 = vrot.slane %v289, %v302
    %v304 = vcombine.high %v296, %v296
    %v305 = vcombine.high %v303, %v303
    %v307 = vunpack.c.l.s4 1966171168
    %v308 = vunpack.c.0.s8 %v307
    %v309 = vlaneseq
    %v310 = vshrl.u32 %v309, 7
    %v311 = vsub.s32 %v308, %v310
    %v312 = vrot.slane %v296, %v311
    %v314 = vunpack.c.l.s4 1966171168
    %v315 = vunpack.c.0.s8 %v314
    %v316 = vlaneseq
    %v317 = vshrl.u32 %v316, 7
    %v318 = vsub.s32 %v315, %v317
    %v319 = vrot.slane %v303, %v318
    %v321 = vunpack.c.l.s4 1966171168
    %v322 = vunpack.c.0.s8 %v321
    %v323 = vlaneseq
    %v324 = vshrl.u32 %v323, 7
    %v325 = vsub.s32 %v322, %v324
    %v326 = vrot.slane %v304, %v325
    %v328 = vunpack.c.l.s4 1966171168
    %v329 = vunpack.c.0.s8 %v328
    %v330 = vlaneseq
    %v331 = vshrl.u32 %v330, 7
    %v332 = vsub.s32 %v329, %v331
    %v333 = vrot.slane %v305, %v332
    %v334 = vcombine.high %v312, %v312
    %v335 = vcombine.high %v319, %v319
    %v336 = vcombine.high %v326, %v326
    %v337 = vcombine.high %v333, %v333
    %v338 = vcombine.high %v23, %v23
    %v340 = vunpack.c.l.s4 1966171168
    %v341 = vunpack.c.0.s8 %v340
    %v342 = vlaneseq
    %v343 = vshrl.u32 %v342, 7
    %v344 = vsub.s32 %v341, %v343
    %v345 = vrot.slane %v23, %v344
    %v347 = vunpack.c.l.s4 1966171168
    %v348 = vunpack.c.0.s8 %v347
    %v349 = vlaneseq
    %v350 = vshrl.u32 %v349, 7
    %v351 = vsub.s32 %v348, %v350
    %v352 = vrot.slane %v338, %v351
    %v353 = vcombine.high %v345, %v345
    %v354 = vcombine.high %v352, %v352
    %v356 = vunpack.c.l.s4 1966171168
    %v357 = vunpack.c.0.s8 %v356
    %v358 = vlaneseq
    %v359 = vshrl.u32 %v358, 7
    %v360 = vsub.s32 %v357, %v359
    %v361 = vrot.slane %v345, %v360
    %v363 = vunpack.c.l.s4 1966171168
    %v364 = vunpack.c.0.s8 %v363
    %v365 = vlaneseq
    %v366 = vshrl.u32 %v365, 7
    %v367 = vsub.s32 %v364, %v366
    %v368 = vrot.slane %v352, %v367
    %v370 = vunpack.c.l.s4 1966171168
    %v371 = vunpack.c.0.s8 %v370
    %v372 = vlaneseq
    %v373 = vshrl.u32 %v372, 7
    %v374 = vsub.s32 %v371, %v373
    %v375 = vrot.slane %v353, %v374
    %v377 = vunpack.c.l.s4 1966171168
    %v378 = vunpack.c.0.s8 %v377
    %v379 = vlaneseq
    %v380 = vshrl.u32 %v379, 7
    %v381 = vsub.s32 %v378, %v380
    %v382 = vrot.slane %v354, %v381
    %v383 = vcombine.high %v361, %v361
    %v384 = vcombine.high %v368, %v368
    %v385 = vcombine.high %v375, %v375
    %v386 = vcombine.high %v382, %v382
    %v659 = vunpack.c.l.b16 %v24
    %v660 = vunpack.c.l.b16 %v25
    %v661 = vunpack.c.l.b16 %v26
    %v662 = vunpack.c.l.b16 %v27
    %v663 = vunpack.c.l.b16 %v28
    %v664 = vunpack.c.l.b16 %v29
    %v665 = vunpack.c.l.b16 %v30
    %v666 = vunpack.c.l.b16 %v31
    %v667 = vunpack.c.l.b16 %v32
    %v668 = vunpack.c.l.b16 %v33
    %v669 = vunpack.c.l.b16 %v34
    %v670 = vunpack.c.l.b16 %v35
    %v671 = vunpack.c.l.b16 %v36
    %v672 = vunpack.c.l.b16 %v37
    %v673 = vunpack.c.l.b16 %v38
    %v674 = vunpack.c.l.b16 %v39
    %v675 = vunpack.c.l.b16 %v40
    %v676 = vunpack.c.l.b16 %v41
    %v677 = vunpack.c.l.b16 %v42
    %v678 = vunpack.c.l.b16 %v43
    %v679 = vunpack.c.l.b16 %v44
    %v680 = vunpack.c.l.b16 %v45
    %v681 = vunpack.c.l.b16 %v46
    %v682 = vunpack.c.l.b16 %v47
    %v683 = vunpack.c.l.b16 %v48
    %v684 = vunpack.c.l.b16 %v49
    %v685 = vunpack.c.l.b16 %v50
    %v686 = vunpack.c.l.b16 %v51
    %v687 = vunpack.c.l.b16 %v52
    %v688 = vunpack.c.l.b16 %v53
    %v689 = vunpack.c.l.b16 %v54
    %v690 = vunpack.c.l.b16 %v55
    %v691 = vunpack.c.l.b16 %v56
    %v692 = vunpack.c.l.b16 %v57
    %v693 = vunpack.c.l.b16 %v58
    %v694 = vunpack.c.l.b16 %v59
    %v695 = vunpack.c.l.b16 %v60
    %v696 = vunpack.c.l.b16 %v61
    %v697 = vunpack.c.l.b16 %v62
    %v698 = vunpack.c.l.b16 %v63
    %v699 = vunpack.c.l.b16 %v64
    %v700 = vunpack.c.l.b16 %v65
    %v701 = vunpack.c.l.b16 %v66
    %v702 = vunpack.c.l.b16 %v67
    %v703 = vunpack.c.l.b16 %v68
    %v704 = vunpack.c.l.b16 %v69
    %v705 = vunpack.c.l.b16 %v70
    %v706 = vunpack.c.l.b16 %v71
    %v707 = vunpack.c.l.b16 %v72
    %v708 = vunpack.c.l.b16 %v73
    %v709 = vunpack.c.l.b16 %v74
    %v710 = vunpack.c.l.b16 %v75
    %v711 = vunpack.c.l.b16 %v76
    %v712 = vunpack.c.l.b16 %v77
    %v713 = vunpack.c.l.b16 %v78
    %v714 = vunpack.c.l.b16 %v79
    %v715 = vunpack.c.l.b16 %v80
    %v716 = vunpack.c.l.b16 %v81
    %v717 = vunpack.c.l.b16 %v82
    %v718 = vunpack.c.l.b16 %v83
    %v719 = vunpack.c.l.b16 %v84
    %v720 = vunpack.c.l.b16 %v85
    %v721 = vunpack.c.l.b16 %v86
    %v722 = vunpack.c.l.b16 %v87
    %v723 = vunpack.c.l.b16 %v88
    %v724 = vunpack.c.l.b16 %v89
    %v725 = vunpack.c.l.b16 %v90
    %v726 = vunpack.c.l.b16 %v91
    %v727 = vunpack.c.l.b16 %v92
    %v728 = vunpack.c.l.b16 %v93
    %v729 = vunpack.c.l.b16 %v94
    %v730 = vunpack.c.l.b16 %v95
    %v731 = vunpack.c.l.b16 %v96
    %v732 = vunpack.c.l.b16 %v97
    %v733 = vunpack.c.l.b16 %v98
    %v734 = vunpack.c.l.b16 %v99
    %v735 = vunpack.c.l.b16 %v100
    %v736 = vunpack.c.l.b16 %v101
    %v737 = vunpack.c.l.b16 %v102
    %v738 = vunpack.c.l.b16 %v103
    %v739 = vunpack.c.l.b16 %v104
    %v740 = vunpack.c.l.b16 %v105
    %v741 = vunpack.c.l.b16 %v106
    %v742 = vunpack.c.l.b16 %v107
    %v743 = vunpack.c.l.b16 %v108
    %v744 = vunpack.c.l.b16 %v109
    %v745 = vunpack.c.l.b16 %v110
    %v746 = vunpack.c.l.b16 %v111
    %v747 = vunpack.c.l.b16 %v112
    %v748 = vunpack.c.l.b16 %v113
    %v749 = vunpack.c.l.b16 %v114
    %v750 = vunpack.c.l.b16 %v115
    %v751 = vunpack.c.l.b16 %v116
    %v752 = vunpack.c.l.b16 %v117
    %v753 = vunpack.c.l.b16 %v118
    %v754 = vunpack.c.l.b16 %v119
    %v755 = vunpack.c.l.b16 %v120
    %v756 = vunpack.c.l.b16 %v121
    %v757 = vunpack.c.l.b16 %v122
    %v758 = vunpack.c.l.b16 %v123
    %v759 = vunpack.c.l.b16 %v124
    %v760 = vunpack.c.l.b16 %v125
    %v761 = vunpack.c.l.b16 %v126
    %v762 = vunpack.c.l.b16 %v127
    %v763 = vunpack.c.l.b16 %v128
    %v764 = vunpack.c.l.b16 %v129
    %v765 = vunpack.c.l.b16 %v130
    %v766 = vunpack.c.l.b16 %v131
    %v767 = vunpack.c.l.b16 %v132
    %v768 = vunpack.c.l.b16 %v133
    %v769 = vunpack.c.l.b16 %v134
    %v770 = vunpack.c.l.b16 %v135
    %v771 = vunpack.c.l.b16 %v136
    %v772 = vunpack.c.l.b16 %v137
    %v773 = vunpack.c.l.b16 %v138
    %v774 = vunpack.c.l.b16 %v139
    %v775 = vunpack.c.l.b16 %v140
    %v776 = vunpack.c.l.b16 %v141
    %v777 = vunpack.c.l.b16 %v142
    %v778 = vunpack.c.l.b16 %v143
    %v779 = vunpack.c.l.b16 %v144
    %v780 = vunpack.c.l.b16 %v145
    %v781 = vunpack.c.l.b16 %v146
    %v782 = vunpack.c.l.b16 %v147
    %v783 = vunpack.c.l.b16 %v148
    %v784 = vunpack.c.l.b16 %v149
    %v785 = vunpack.c.l.b16 %v150
    %v786 = vunpack.c.l.b16 %v151
    %v787 = vunpack.c.l.b16 %v152
    %v788 = vunpack.c.l.b16 %v153
    %v789 = vunpack.c.l.b16 %v154
    %v790 = vunpack.c.l.b16 %v155
    %v791 = vunpack.c.l.b16 %v156
    %v792 = vunpack.c.l.b16 %v157
    %v793 = vunpack.c.l.b16 %v158
    %v794 = vunpack.c.l.b16 %v159
    %v795 = vunpack.c.l.b16 %v160
    %v796 = vunpack.c.l.b16 %v161
    %v797 = vunpack.c.l.b16 %v162
    %v798 = vunpack.c.l.b16 %v163
    %v799 = vunpack.c.l.b16 %v164
    %v800 = vunpack.c.l.b16 %v165
    %v801 = vunpack.c.l.b16 %v166
    %v802 = vunpack.c.l.b16 %v167
    %v803 = vunpack.c.l.b16 %v168
    %v804 = vunpack.c.l.b16 %v169
    %v805 = vunpack.c.l.b16 %v170
    %v806 = vunpack.c.l.b16 %v171
    %v807 = vunpack.c.l.b16 %v172
    %v808 = vunpack.c.l.b16 %v173
    %v809 = vunpack.c.l.b16 %v174
    %v810 = vunpack.c.l.b16 %v175
    %v811 = vunpack.c.l.b16 %v176
    %v812 = vunpack.c.l.b16 %v177
    %v813 = vunpack.c.l.b16 %v178
    %v814 = vunpack.c.l.b16 %v179
    %v815 = vunpack.c.l.b16 %v180
    %v816 = vunpack.c.l.b16 %v181
    %v817 = vunpack.c.l.b16 %v182
    %v818 = vunpack.c.l.b16 %v183
    %v819 = vunpack.c.l.b16 %v184
    %v820 = vunpack.c.l.b16 %v185
    %v821 = vunpack.c.l.b16 %v186
    %v822 = vunpack.c.l.b16 %v187
    %v823 = vunpack.c.l.b16 %v188
    %v824 = vunpack.c.l.b16 %v189
    %v825 = vunpack.c.l.b16 %v190
    %v826 = vunpack.c.l.b16 %v191
    %v827 = vunpack.c.l.b16 %v192
    %v828 = vunpack.c.l.b16 %v193
    %v829 = vunpack.c.l.b16 %v194
    %v830 = vunpack.c.l.b16 %v195
    %v831 = vunpack.c.l.b16 %v196
    %v832 = vunpack.c.l.b16 %v197
    %v833 = vunpack.c.l.b16 %v198
    %v834 = vunpack.c.l.b16 %v199
    %v835 = vunpack.c.l.b16 %v200
    %v836 = vunpack.c.l.b16 %v201
    %v837 = vunpack.c.l.b16 %v202
    %v838 = vunpack.c.l.b16 %v203
    %v839 = vunpack.c.l.b16 %v204
    %v840 = vunpack.c.l.b16 %v205
    %v841 = vunpack.c.l.b16 %v206
    %v842 = vunpack.c.l.b16 %v207
    %v843 = vunpack.c.l.b16 %v208
    %v844 = vunpack.c.l.b16 %v209
    %v845 = vunpack.c.l.b16 %v210
    %v846 = vunpack.c.l.b16 %v211
    %v847 = vunpack.c.l.b16 %v212
    %v848 = vunpack.c.l.b16 %v213
    %v849 = vunpack.c.l.b16 %v214
    %v850 = vunpack.c.l.b16 %v215
    %v851 = vunpack.c.l.b16 %v216
    %v852 = vunpack.c.l.b16 %v217
    %v853 = vunpack.c.l.b16 %v218
    %v854 = vunpack.c.l.b16 %v219
    %v855 = vunpack.c.l.b16 %v220
    %v856 = vunpack.c.l.b16 %v221
    %v857 = vunpack.c.l.b16 %v222
    %v858 = vunpack.c.l.b16 %v223
    %v859 = vunpack.c.l.b16 %v224
    %v860 = vunpack.c.l.b16 %v225
    %v861 = vunpack.c.l.b16 %v226
    %v862 = vunpack.c.l.b16 %v227
    %v863 = vunpack.c.l.b16 %v228
    %v864 = vunpack.c.l.b16 %v229
    %v865 = vunpack.c.l.b16 %v230
    %v866 = vunpack.c.l.b16 %v231
    %v867 = vunpack.c.l.b16 %v232
    %v868 = vunpack.c.l.b16 %v233
    %v869 = vunpack.c.l.b16 %v234
    %v870 = vunpack.c.l.b16 %v235
    %v871 = vunpack.c.l.b16 %v236
    %v872 = vunpack.c.l.b16 %v237
    %v873 = vunpack.c.l.b16 %v238
    %v874 = vunpack.c.l.b16 %v239
    %v875 = vunpack.c.l.b16 %v240
    %v876 = vunpack.c.l.b16 %v241
    %v877 = vunpack.c.l.b16 %v242
    %v878 = vunpack.c.l.b16 %v243
    %v879 = vunpack.c.l.b16 %v244
    %v880 = vunpack.c.l.b16 %v245
    %v881 = vunpack.c.l.b16 %v246
    %v882 = vunpack.c.l.b16 %v247
    %v883 = vunpack.c.l.b16 %v248
    %v884 = vunpack.c.l.b16 %v249
    %v885 = vunpack.c.l.b16 %v250
    %v886 = vunpack.c.l.b16 %v251
    %v887 = vunpack.c.l.b16 %v252
    %v888 = vunpack.c.l.b16 %v253
    %v889 = vunpack.c.l.b16 %v254
    %v890 = vunpack.c.l.b16 %v255
    %v891 = vunpack.c.l.b16 %v256
    %v892 = vunpack.c.l.b16 %v257
    %v893 = vunpack.c.l.b16 %v258
    %v894 = vunpack.c.l.b16 %v259
    %v895 = vunpack.c.l.b16 %v260
    %v896 = vunpack.c.l.b16 %v261
    %v897 = vunpack.c.l.b16 %v262
    %v898 = vunpack.c.l.b16 %v263
    %v899 = vunpack.c.l.b16 %v264
    %v900 = vunpack.c.l.b16 %v265
    %v901 = vunpack.c.l.b16 %v266
    %v902 = vunpack.c.l.b16 %v267
    %v903 = vunpack.c.l.b16 %v268
    %v904 = vunpack.c.l.b16 %v269
    %v905 = vunpack.c.l.b16 %v270
    %v906 = vunpack.c.l.b16 %v271
    %v907 = vunpack.c.l.b16 %v272
    %v908 = vunpack.c.l.b16 %v273
    %v909 = vunpack.c.l.b16 %v274
    %v910 = vunpack.c.l.b16 %v275
    %v911 = vunpack.c.l.b16 %v276
    %v912 = vunpack.c.l.b16 %v277
    %v913 = vunpack.c.l.b16 %v278
    %v914 = vunpack.c.l.b16 %v279
    %v915 = vpack.c.b16 %v660, %v659
    %v916 = vpack.c.b16 %v662, %v661
    %v917 = vpack.c.b16 %v664, %v663
    %v918 = vpack.c.b16 %v666, %v665
    %v919 = vpack.c.b16 %v668, %v667
    %v920 = vpack.c.b16 %v670, %v669
    %v921 = vpack.c.b16 %v672, %v671
    %v922 = vpack.c.b16 %v674, %v673
    %v923 = vpack.c.b16 %v676, %v675
    %v924 = vpack.c.b16 %v678, %v677
    %v925 = vpack.c.b16 %v680, %v679
    %v926 = vpack.c.b16 %v682, %v681
    %v927 = vpack.c.b16 %v684, %v683
    %v928 = vpack.c.b16 %v686, %v685
    %v929 = vpack.c.b16 %v688, %v687
    %v930 = vpack.c.b16 %v690, %v689
    %v931 = vpack.c.b16 %v692, %v691
    %v932 = vpack.c.b16 %v694, %v693
    %v933 = vpack.c.b16 %v696, %v695
    %v934 = vpack.c.b16 %v698, %v697
    %v935 = vpack.c.b16 %v700, %v699
    %v936 = vpack.c.b16 %v702, %v701
    %v937 = vpack.c.b16 %v704, %v703
    %v938 = vpack.c.b16 %v706, %v705
    %v939 = vpack.c.b16 %v708, %v707
    %v940 = vpack.c.b16 %v710, %v709
    %v941 = vpack.c.b16 %v712, %v711
    %v942 = vpack.c.b16 %v714, %v713
    %v943 = vpack.c.b16 %v716, %v715
    %v944 = vpack.c.b16 %v718, %v717
    %v945 = vpack.c.b16 %v720, %v719
    %v946 = vpack.c.b16 %v722, %v721
    %v947 = vpack.c.b16 %v724, %v723
    %v948 = vpack.c.b16 %v726, %v725
    %v949 = vpack.c.b16 %v728, %v727
    %v950 = vpack.c.b16 %v730, %v729
    %v951 = vpack.c.b16 %v732, %v731
    %v952 = vpack.c.b16 %v734, %v733
    %v953 = vpack.c.b16 %v736, %v735
    %v954 = vpack.c.b16 %v738, %v737
    %v955 = vpack.c.b16 %v740, %v739
    %v956 = vpack.c.b16 %v742, %v741
    %v957 = vpack.c.b16 %v744, %v743
    %v958 = vpack.c.b16 %v746, %v745
    %v959 = vpack.c.b16 %v748, %v747
    %v960 = vpack.c.b16 %v750, %v749
    %v961 = vpack.c.b16 %v752, %v751
    %v962 = vpack.c.b16 %v754, %v753
    %v963 = vpack.c.b16 %v756, %v755
    %v964 = vpack.c.b16 %v758, %v757
    %v965 = vpack.c.b16 %v760, %v759
    %v966 = vpack.c.b16 %v762, %v761
    %v967 = vpack.c.b16 %v764, %v763
    %v968 = vpack.c.b16 %v766, %v765
    %v969 = vpack.c.b16 %v768, %v767
    %v970 = vpack.c.b16 %v770, %v769
    %v971 = vpack.c.b16 %v772, %v771
    %v972 = vpack.c.b16 %v774, %v773
    %v973 = vpack.c.b16 %v776, %v775
    %v974 = vpack.c.b16 %v778, %v777
    %v975 = vpack.c.b16 %v780, %v779
    %v976 = vpack.c.b16 %v782, %v781
    %v977 = vpack.c.b16 %v784, %v783
    %v978 = vpack.c.b16 %v786, %v785
    %v979 = vpack.c.b16 %v788, %v787
    %v980 = vpack.c.b16 %v790, %v789
    %v981 = vpack.c.b16 %v792, %v791
    %v982 = vpack.c.b16 %v794, %v793
    %v983 = vpack.c.b16 %v796, %v795
    %v984 = vpack.c.b16 %v798, %v797
    %v985 = vpack.c.b16 %v800, %v799
    %v986 = vpack.c.b16 %v802, %v801
    %v987 = vpack.c.b16 %v804, %v803
    %v988 = vpack.c.b16 %v806, %v805
    %v989 = vpack.c.b16 %v808, %v807
    %v990 = vpack.c.b16 %v810, %v809
    %v991 = vpack.c.b16 %v812, %v811
    %v992 = vpack.c.b16 %v814, %v813
    %v993 = vpack.c.b16 %v816, %v815
    %v994 = vpack.c.b16 %v818, %v817
    %v995 = vpack.c.b16 %v820, %v819
    %v996 = vpack.c.b16 %v822, %v821
    %v997 = vpack.c.b16 %v824, %v823
    %v998 = vpack.c.b16 %v826, %v825
    %v999 = vpack.c.b16 %v828, %v827
    %v1000 = vpack.c.b16 %v830, %v829
    %v1001 = vpack.c.b16 %v832, %v831
    %v1002 = vpack.c.b16 %v834, %v833
    %v1003 = vpack.c.b16 %v836, %v835
    %v1004 = vpack.c.b16 %v838, %v837
    %v1005 = vpack.c.b16 %v840, %v839
    %v1006 = vpack.c.b16 %v842, %v841
    %v1007 = vpack.c.b16 %v844, %v843
    %v1008 = vpack.c.b16 %v846, %v845
    %v1009 = vpack.c.b16 %v848, %v847
    %v1010 = vpack.c.b16 %v850, %v849
    %v1011 = vpack.c.b16 %v852, %v851
    %v1012 = vpack.c.b16 %v854, %v853
    %v1013 = vpack.c.b16 %v856, %v855
    %v1014 = vpack.c.b16 %v858, %v857
    %v1015 = vpack.c.b16 %v860, %v859
    %v1016 = vpack.c.b16 %v862, %v861
    %v1017 = vpack.c.b16 %v864, %v863
    %v1018 = vpack.c.b16 %v866, %v865
    %v1019 = vpack.c.b16 %v868, %v867
    %v1020 = vpack.c.b16 %v870, %v869
    %v1021 = vpack.c.b16 %v872, %v871
    %v1022 = vpack.c.b16 %v874, %v873
    %v1023 = vpack.c.b16 %v876, %v875
    %v1024 = vpack.c.b16 %v878, %v877
    %v1025 = vpack.c.b16 %v880, %v879
    %v1026 = vpack.c.b16 %v882, %v881
    %v1027 = vpack.c.b16 %v884, %v883
    %v1028 = vpack.c.b16 %v886, %v885
    %v1029 = vpack.c.b16 %v888, %v887
    %v1030 = vpack.c.b16 %v890, %v889
    %v1031 = vpack.c.b16 %v892, %v891
    %v1032 = vpack.c.b16 %v894, %v893
    %v1033 = vpack.c.b16 %v896, %v895
    %v1034 = vpack.c.b16 %v898, %v897
    %v1035 = vpack.c.b16 %v900, %v899
    %v1036 = vpack.c.b16 %v902, %v901
    %v1037 = vpack.c.b16 %v904, %v903
    %v1038 = vpack.c.b16 %v906, %v905
    %v1039 = vpack.c.b16 %v908, %v907
    %v1040 = vpack.c.b16 %v910, %v909
    %v1041 = vpack.c.b16 %v912, %v911
    %v1042 = vpack.c.b16 %v914, %v913
    %1171 = vmatprep.subr.bf16.mxu0 0
    %1172 = vmatpush1.bf16.msra.mxu0 %v922
    %1173 = vmatprep.subr.bf16.mxu0 0
    %1174 = vmatpush1.bf16.msra.mxu0 %v921
    %1175 = vmatprep.subr.bf16.mxu0 0
    %1176 = vmatpush1.bf16.msra.mxu0 %v920
    %1177 = vmatprep.subr.bf16.mxu0 0
    %1178 = vmatpush1.bf16.msra.mxu0 %v919
    %1179 = vmatprep.subr.bf16.mxu0 0
    %1180 = vmatpush1.bf16.msra.mxu0 %v918
    %1181 = vmatprep.subr.bf16.mxu0 0
    %1182 = vmatpush1.bf16.msra.mxu0 %v917
    %1183 = vmatprep.subr.bf16.mxu0 0
    %1184 = vmatpush1.bf16.msra.mxu0 %v916
    %1185 = vmatprep.subr.bf16.mxu0 0
    %1186 = vmatpush1.bf16.msra.mxu0 %v915
    %1187 = vmatprep.subr.bf16.mxu0 0
    %1188 = vmatpush2.bf16.msra.mxu0 %v930
    %1189 = vmatprep.subr.bf16.mxu0 0
    %1190 = vmatpush2.bf16.msra.mxu0 %v929
    %1191 = vmatprep.subr.bf16.mxu0 0
    %1192 = vmatpush2.bf16.msra.mxu0 %v928
    %1193 = vmatprep.subr.bf16.mxu0 0
    %1194 = vmatpush2.bf16.msra.mxu0 %v927
    %1195 = vmatprep.subr.bf16.mxu0 0
    %1196 = vmatpush2.bf16.msra.mxu0 %v926
    %1197 = vmatprep.subr.bf16.mxu0 0
    %1198 = vmatpush2.bf16.msra.mxu0 %v925
    %1199 = vmatprep.subr.bf16.mxu0 0
    %1200 = vmatpush2.bf16.msra.mxu0 %v924
    %1201 = vmatprep.subr.bf16.mxu0 0
    %1202 = vmatpush2.bf16.msra.mxu0 %v923
    %1203 = vmatprep.mubr.bf16.mxu0 %v326
    %1204 = vmatmul.mubr.bf16.gmra.mxu0 %v312
    %v1205 = vpop.f32.mrf.mxu0
    %v1206 = vadd.f32 %v285, %v1205
    %v1207 = vpop.f32.mrf.mxu0
    %v1208 = vpop.f32.mrf.mxu0
    %v1209 = vpop.f32.mrf.mxu0
    %1210 = vdwg.mxu0
    %1211 = vmatprep.subr.bf16.mxu0 0
    %1212 = vmatpush1.bf16.msra.mxu0 %v938
    %1213 = vmatprep.subr.bf16.mxu0 0
    %1214 = vmatpush1.bf16.msra.mxu0 %v937
    %1215 = vmatprep.subr.bf16.mxu0 0
    %1216 = vmatpush1.bf16.msra.mxu0 %v936
    %1217 = vmatprep.subr.bf16.mxu0 0
    %1218 = vmatpush1.bf16.msra.mxu0 %v935
    %1219 = vmatprep.subr.bf16.mxu0 0
    %1220 = vmatpush1.bf16.msra.mxu0 %v934
    %1221 = vmatprep.subr.bf16.mxu0 0
    %1222 = vmatpush1.bf16.msra.mxu0 %v933
    %1223 = vmatprep.subr.bf16.mxu0 0
    %1224 = vmatpush1.bf16.msra.mxu0 %v932
    %1225 = vmatprep.subr.bf16.mxu0 0
    %1226 = vmatpush1.bf16.msra.mxu0 %v931
    %1227 = vmatprep.subr.bf16.mxu0 0
    %1228 = vmatpush2.bf16.msra.mxu0 %v946
    %1229 = vmatprep.subr.bf16.mxu0 0
    %1230 = vmatpush2.bf16.msra.mxu0 %v945
    %1231 = vmatprep.subr.bf16.mxu0 0
    %1232 = vmatpush2.bf16.msra.mxu0 %v944
    %1233 = vmatprep.subr.bf16.mxu0 0
    %1234 = vmatpush2.bf16.msra.mxu0 %v943
    %1235 = vmatprep.subr.bf16.mxu0 0
    %1236 = vmatpush2.bf16.msra.mxu0 %v942
    %1237 = vmatprep.subr.bf16.mxu0 0
    %1238 = vmatpush2.bf16.msra.mxu0 %v941
    %1239 = vmatprep.subr.bf16.mxu0 0
    %1240 = vmatpush2.bf16.msra.mxu0 %v940
    %1241 = vmatprep.subr.bf16.mxu0 0
    %1242 = vmatpush2.bf16.msra.mxu0 %v939
    %1243 = vmatprep.mubr.bf16.mxu0 %v336
    %1244 = vmatmul.mubr.bf16.gmra.mxu0 %v334
    %v1245 = vpop.f32.mrf.mxu0
    %v1246 = vadd.f32 %v1206, %v1245
    %v1247 = vpop.f32.mrf.mxu0
    %v1248 = vpop.f32.mrf.mxu0
    %v1249 = vpop.f32.mrf.mxu0
    %1250 = vdwg.mxu0
    %1251 = vmatprep.subr.bf16.mxu0 0
    %1252 = vmatpush1.bf16.msra.mxu0 %v954
    %1253 = vmatprep.subr.bf16.mxu0 0
    %1254 = vmatpush1.bf16.msra.mxu0 %v953
    %1255 = vmatprep.subr.bf16.mxu0 0
    %1256 = vmatpush1.bf16.msra.mxu0 %v952
    %1257 = vmatprep.subr.bf16.mxu0 0
    %1258 = vmatpush1.bf16.msra.mxu0 %v951
    %1259 = vmatprep.subr.bf16.mxu0 0
    %1260 = vmatpush1.bf16.msra.mxu0 %v950
    %1261 = vmatprep.subr.bf16.mxu0 0
    %1262 = vmatpush1.bf16.msra.mxu0 %v949
    %1263 = vmatprep.subr.bf16.mxu0 0
    %1264 = vmatpush1.bf16.msra.mxu0 %v948
    %1265 = vmatprep.subr.bf16.mxu0 0
    %1266 = vmatpush1.bf16.msra.mxu0 %v947
    %1267 = vmatprep.subr.bf16.mxu0 0
    %1268 = vmatpush2.bf16.msra.mxu0 %v962
    %1269 = vmatprep.subr.bf16.mxu0 0
    %1270 = vmatpush2.bf16.msra.mxu0 %v961
    %1271 = vmatprep.subr.bf16.mxu0 0
    %1272 = vmatpush2.bf16.msra.mxu0 %v960
    %1273 = vmatprep.subr.bf16.mxu0 0
    %1274 = vmatpush2.bf16.msra.mxu0 %v959
    %1275 = vmatprep.subr.bf16.mxu0 0
    %1276 = vmatpush2.bf16.msra.mxu0 %v958
    %1277 = vmatprep.subr.bf16.mxu0 0
    %1278 = vmatpush2.bf16.msra.mxu0 %v957
    %1279 = vmatprep.subr.bf16.mxu0 0
    %1280 = vmatpush2.bf16.msra.mxu0 %v956
    %1281 = vmatprep.subr.bf16.mxu0 0
    %1282 = vmatpush2.bf16.msra.mxu0 %v955
    %1283 = vmatprep.mubr.bf16.mxu0 %v333
    %1284 = vmatmul.mubr.bf16.gmra.mxu0 %v319
    %v1285 = vpop.f32.mrf.mxu0
    %v1286 = vadd.f32 %v1246, %v1285
    %v1287 = vpop.f32.mrf.mxu0
    %v1288 = vpop.f32.mrf.mxu0
    %v1289 = vpop.f32.mrf.mxu0
    %1290 = vdwg.mxu0
    %1291 = vmatprep.subr.bf16.mxu0 0
    %1292 = vmatpush1.bf16.msra.mxu0 %v970
    %1293 = vmatprep.subr.bf16.mxu0 0
    %1294 = vmatpush1.bf16.msra.mxu0 %v969
    %1295 = vmatprep.subr.bf16.mxu0 0
    %1296 = vmatpush1.bf16.msra.mxu0 %v968
    %1297 = vmatprep.subr.bf16.mxu0 0
    %1298 = vmatpush1.bf16.msra.mxu0 %v967
    %1299 = vmatprep.subr.bf16.mxu0 0
    %1300 = vmatpush1.bf16.msra.mxu0 %v966
    %1301 = vmatprep.subr.bf16.mxu0 0
    %1302 = vmatpush1.bf16.msra.mxu0 %v965
    %1303 = vmatprep.subr.bf16.mxu0 0
    %1304 = vmatpush1.bf16.msra.mxu0 %v964
    %1305 = vmatprep.subr.bf16.mxu0 0
    %1306 = vmatpush1.bf16.msra.mxu0 %v963
    %1307 = vmatprep.subr.bf16.mxu0 0
    %1308 = vmatpush2.bf16.msra.mxu0 %v978
    %1309 = vmatprep.subr.bf16.mxu0 0
    %1310 = vmatpush2.bf16.msra.mxu0 %v977
    %1311 = vmatprep.subr.bf16.mxu0 0
    %1312 = vmatpush2.bf16.msra.mxu0 %v976
    %1313 = vmatprep.subr.bf16.mxu0 0
    %1314 = vmatpush2.bf16.msra.mxu0 %v975
    %1315 = vmatprep.subr.bf16.mxu0 0
    %1316 = vmatpush2.bf16.msra.mxu0 %v974
    %1317 = vmatprep.subr.bf16.mxu0 0
    %1318 = vmatpush2.bf16.msra.mxu0 %v973
    %1319 = vmatprep.subr.bf16.mxu0 0
    %1320 = vmatpush2.bf16.msra.mxu0 %v972
    %1321 = vmatprep.subr.bf16.mxu0 0
    %1322 = vmatpush2.bf16.msra.mxu0 %v971
    %1323 = vmatprep.mubr.bf16.mxu0 %v337
    %1324 = vmatmul.mubr.bf16.gmra.mxu0 %v335
    %v1325 = vpop.f32.mrf.mxu0
    %v1326 = vadd.f32 %v1286, %v1325
    %v1327 = vpop.f32.mrf.mxu0
    %v1328 = vpop.f32.mrf.mxu0
    %v1329 = vpop.f32.mrf.mxu0
    %1330 = vdwg.mxu0
    %1331 = vmatprep.subr.bf16.mxu0 0
    %1332 = vmatpush1.bf16.msra.mxu0 %v986
    %1333 = vmatprep.subr.bf16.mxu0 0
    %1334 = vmatpush1.bf16.msra.mxu0 %v985
    %1335 = vmatprep.subr.bf16.mxu0 0
    %1336 = vmatpush1.bf16.msra.mxu0 %v984
    %1337 = vmatprep.subr.bf16.mxu0 0
    %1338 = vmatpush1.bf16.msra.mxu0 %v983
    %1339 = vmatprep.subr.bf16.mxu0 0
    %1340 = vmatpush1.bf16.msra.mxu0 %v982
    %1341 = vmatprep.subr.bf16.mxu0 0
    %1342 = vmatpush1.bf16.msra.mxu0 %v981
    %1343 = vmatprep.subr.bf16.mxu0 0
    %1344 = vmatpush1.bf16.msra.mxu0 %v980
    %1345 = vmatprep.subr.bf16.mxu0 0
    %1346 = vmatpush1.bf16.msra.mxu0 %v979
    %1347 = vmatprep.subr.bf16.mxu0 0
    %1348 = vmatpush2.bf16.msra.mxu0 %v994
    %1349 = vmatprep.subr.bf16.mxu0 0
    %1350 = vmatpush2.bf16.msra.mxu0 %v993
    %1351 = vmatprep.subr.bf16.mxu0 0
    %1352 = vmatpush2.bf16.msra.mxu0 %v992
    %1353 = vmatprep.subr.bf16.mxu0 0
    %1354 = vmatpush2.bf16.msra.mxu0 %v991
    %1355 = vmatprep.subr.bf16.mxu0 0
    %1356 = vmatpush2.bf16.msra.mxu0 %v990
    %1357 = vmatprep.subr.bf16.mxu0 0
    %1358 = vmatpush2.bf16.msra.mxu0 %v989
    %1359 = vmatprep.subr.bf16.mxu0 0
    %1360 = vmatpush2.bf16.msra.mxu0 %v988
    %1361 = vmatprep.subr.bf16.mxu0 0
    %1362 = vmatpush2.bf16.msra.mxu0 %v987
    %1363 = vmatprep.mubr.bf16.mxu0 %v375
    %1364 = vmatmul.mubr.bf16.gmra.mxu0 %v361
    %v1365 = vpop.f32.mrf.mxu0
    %v1366 = vadd.f32 %v1326, %v1365
    %v1367 = vpop.f32.mrf.mxu0
    %v1368 = vpop.f32.mrf.mxu0
    %v1369 = vpop.f32.mrf.mxu0
    %1370 = vdwg.mxu0
    %1371 = vmatprep.subr.bf16.mxu0 0
    %1372 = vmatpush1.bf16.msra.mxu0 %v1002
    %1373 = vmatprep.subr.bf16.mxu0 0
    %1374 = vmatpush1.bf16.msra.mxu0 %v1001
    %1375 = vmatprep.subr.bf16.mxu0 0
    %1376 = vmatpush1.bf16.msra.mxu0 %v1000
    %1377 = vmatprep.subr.bf16.mxu0 0
    %1378 = vmatpush1.bf16.msra.mxu0 %v999
    %1379 = vmatprep.subr.bf16.mxu0 0
    %1380 = vmatpush1.bf16.msra.mxu0 %v998
    %1381 = vmatprep.subr.bf16.mxu0 0
    %1382 = vmatpush1.bf16.msra.mxu0 %v997
    %1383 = vmatprep.subr.bf16.mxu0 0
    %1384 = vmatpush1.bf16.msra.mxu0 %v996
    %1385 = vmatprep.subr.bf16.mxu0 0
    %1386 = vmatpush1.bf16.msra.mxu0 %v995
    %1387 = vmatprep.subr.bf16.mxu0 0
    %1388 = vmatpush2.bf16.msra.mxu0 %v1010
    %1389 = vmatprep.subr.bf16.mxu0 0
    %1390 = vmatpush2.bf16.msra.mxu0 %v1009
    %1391 = vmatprep.subr.bf16.mxu0 0
    %1392 = vmatpush2.bf16.msra.mxu0 %v1008
    %1393 = vmatprep.subr.bf16.mxu0 0
    %1394 = vmatpush2.bf16.msra.mxu0 %v1007
    %1395 = vmatprep.subr.bf16.mxu0 0
    %1396 = vmatpush2.bf16.msra.mxu0 %v1006
    %1397 = vmatprep.subr.bf16.mxu0 0
    %1398 = vmatpush2.bf16.msra.mxu0 %v1005
    %1399 = vmatprep.subr.bf16.mxu0 0
    %1400 = vmatpush2.bf16.msra.mxu0 %v1004
    %1401 = vmatprep.subr.bf16.mxu0 0
    %1402 = vmatpush2.bf16.msra.mxu0 %v1003
    %1403 = vmatprep.mubr.bf16.mxu0 %v385
    %1404 = vmatmul.mubr.bf16.gmra.mxu0 %v383
    %v1405 = vpop.f32.mrf.mxu0
    %v1406 = vadd.f32 %v1366, %v1405
    %v1407 = vpop.f32.mrf.mxu0
    %v1408 = vpop.f32.mrf.mxu0
    %v1409 = vpop.f32.mrf.mxu0
    %1410 = vdwg.mxu0
    %1411 = vmatprep.subr.bf16.mxu0 0
    %1412 = vmatpush1.bf16.msra.mxu0 %v1018
    %1413 = vmatprep.subr.bf16.mxu0 0
    %1414 = vmatpush1.bf16.msra.mxu0 %v1017
    %1415 = vmatprep.subr.bf16.mxu0 0
    %1416 = vmatpush1.bf16.msra.mxu0 %v1016
    %1417 = vmatprep.subr.bf16.mxu0 0
    %1418 = vmatpush1.bf16.msra.mxu0 %v1015
    %1419 = vmatprep.subr.bf16.mxu0 0
    %1420 = vmatpush1.bf16.msra.mxu0 %v1014
    %1421 = vmatprep.subr.bf16.mxu0 0
    %1422 = vmatpush1.bf16.msra.mxu0 %v1013
    %1423 = vmatprep.subr.bf16.mxu0 0
    %1424 = vmatpush1.bf16.msra.mxu0 %v1012
    %1425 = vmatprep.subr.bf16.mxu0 0
    %1426 = vmatpush1.bf16.msra.mxu0 %v1011
    %1427 = vmatprep.subr.bf16.mxu0 0
    %1428 = vmatpush2.bf16.msra.mxu0 %v1026
    %1429 = vmatprep.subr.bf16.mxu0 0
    %1430 = vmatpush2.bf16.msra.mxu0 %v1025
    %1431 = vmatprep.subr.bf16.mxu0 0
    %1432 = vmatpush2.bf16.msra.mxu0 %v1024
    %1433 = vmatprep.subr.bf16.mxu0 0
    %1434 = vmatpush2.bf16.msra.mxu0 %v1023
    %1435 = vmatprep.subr.bf16.mxu0 0
    %1436 = vmatpush2.bf16.msra.mxu0 %v1022
    %1437 = vmatprep.subr.bf16.mxu0 0
    %1438 = vmatpush2.bf16.msra.mxu0 %v1021
    %1439 = vmatprep.subr.bf16.mxu0 0
    %1440 = vmatpush2.bf16.msra.mxu0 %v1020
    %1441 = vmatprep.subr.bf16.mxu0 0
    %1442 = vmatpush2.bf16.msra.mxu0 %v1019
    %1443 = vmatprep.mubr.bf16.mxu0 %v382
    %1444 = vmatmul.mubr.bf16.gmra.mxu0 %v368
    %v1445 = vpop.f32.mrf.mxu0
    %v1446 = vadd.f32 %v1406, %v1445
    %v1447 = vpop.f32.mrf.mxu0
    %v1448 = vpop.f32.mrf.mxu0
    %v1449 = vpop.f32.mrf.mxu0
    %1450 = vdwg.mxu0
    %1451 = vmatprep.subr.bf16.mxu0 0
    %1452 = vmatpush1.bf16.msra.mxu0 %v1034
    %1453 = vmatprep.subr.bf16.mxu0 0
    %1454 = vmatpush1.bf16.msra.mxu0 %v1033
    %1455 = vmatprep.subr.bf16.mxu0 0
    %1456 = vmatpush1.bf16.msra.mxu0 %v1032
    %1457 = vmatprep.subr.bf16.mxu0 0
    %1458 = vmatpush1.bf16.msra.mxu0 %v1031
    %1459 = vmatprep.subr.bf16.mxu0 0
    %1460 = vmatpush1.bf16.msra.mxu0 %v1030
    %1461 = vmatprep.subr.bf16.mxu0 0
    %1462 = vmatpush1.bf16.msra.mxu0 %v1029
    %1463 = vmatprep.subr.bf16.mxu0 0
    %1464 = vmatpush1.bf16.msra.mxu0 %v1028
    %1465 = vmatprep.subr.bf16.mxu0 0
    %1466 = vmatpush1.bf16.msra.mxu0 %v1027
    %1467 = vmatprep.subr.bf16.mxu0 0
    %1468 = vmatpush2.bf16.msra.mxu0 %v1042
    %1469 = vmatprep.subr.bf16.mxu0 0
    %1470 = vmatpush2.bf16.msra.mxu0 %v1041
    %1471 = vmatprep.subr.bf16.mxu0 0
    %1472 = vmatpush2.bf16.msra.mxu0 %v1040
    %1473 = vmatprep.subr.bf16.mxu0 0
    %1474 = vmatpush2.bf16.msra.mxu0 %v1039
    %1475 = vmatprep.subr.bf16.mxu0 0
    %1476 = vmatpush2.bf16.msra.mxu0 %v1038
    %1477 = vmatprep.subr.bf16.mxu0 0
    %1478 = vmatpush2.bf16.msra.mxu0 %v1037
    %1479 = vmatprep.subr.bf16.mxu0 0
    %1480 = vmatpush2.bf16.msra.mxu0 %v1036
    %1481 = vmatprep.subr.bf16.mxu0 0
    %1482 = vmatpush2.bf16.msra.mxu0 %v1035
    %1483 = vmatprep.mubr.bf16.mxu0 %v386
    %1484 = vmatmul.mubr.bf16.gmra.mxu0 %v384
    %v1485 = vpop.f32.mrf.mxu0
    %v1486 = vadd.f32 %v1446, %v1485
    %v1487 = vpop.f32.mrf.mxu0
    %v1488 = vpop.f32.mrf.mxu0
    %v1489 = vpop.f32.mrf.mxu0
    %1490 = vdwg.mxu0
    %v1491 = vmax.f32 %v1486, 0.0
    %v1492 = vpack.c.bf16 %v1491, %v1491
    %v1493 = vld [vmem:[%s3] sm:$0xf]
    %v1494 = vld [vmem:[%s3 + $0x4] sm:$0xf]
    %v1495 = vld [vmem:[%s3 + $0x8] sm:$0xf]
    %v1496 = vld [vmem:[%s3 + $0xc] sm:$0xf]
    %v1497 = vld [vmem:[%s3 + $0x10] sm:$0xf]
    %v1498 = vld [vmem:[%s3 + $0x14] sm:$0xf]
    %v1499 = vld [vmem:[%s3 + $0x18] sm:$0xf]
    %v1500 = vld [vmem:[%s3 + $0x1c] sm:$0xf]
    %v1501 = vld [vmem:[%s3 + $0x20] sm:$0xf]
    %v1502 = vld [vmem:[%s3 + $0x24] sm:$0xf]
    %v1503 = vld [vmem:[%s3 + $0x28] sm:$0xf]
    %v1504 = vld [vmem:[%s3 + $0x2c] sm:$0xf]
    %v1505 = vld [vmem:[%s3 + $0x30] sm:$0xf]
    %v1506 = vld [vmem:[%s3 + $0x34] sm:$0xf]
    %v1507 = vld [vmem:[%s3 + $0x38] sm:$0xf]
    %v1508 = vld [vmem:[%s3 + $0x3c] sm:$0xf]
    %v1509 = vld [vmem:[%s4] sm:$0x1]
    %v1511 = vlaneseq
    %v1512 = vshrl.u32 %v1511, 7
    %v1513 = vsub.s32 0, %v1512
    %v1514 = vrot.slane %v1509, %v1513
    %v1532 = vunpack.c.l.b16 %v1493
    %v1533 = vunpack.c.l.b16 %v1494
    %v1534 = vunpack.c.l.b16 %v1495
    %v1535 = vunpack.c.l.b16 %v1496
    %v1536 = vunpack.c.l.b16 %v1497
    %v1537 = vunpack.c.l.b16 %v1498
    %v1538 = vunpack.c.l.b16 %v1499
    %v1539 = vunpack.c.l.b16 %v1500
    %v1540 = vunpack.c.l.b16 %v1501
    %v1541 = vunpack.c.l.b16 %v1502
    %v1542 = vunpack.c.l.b16 %v1503
    %v1543 = vunpack.c.l.b16 %v1504
    %v1544 = vunpack.c.l.b16 %v1505
    %v1545 = vunpack.c.l.b16 %v1506
    %v1546 = vunpack.c.l.b16 %v1507
    %v1547 = vunpack.c.l.b16 %v1508
    %v1548 = vpack.c.b16 %v1533, %v1532
    %v1549 = vpack.c.b16 %v1535, %v1534
    %v1550 = vpack.c.b16 %v1537, %v1536
    %v1551 = vpack.c.b16 %v1539, %v1538
    %v1552 = vpack.c.b16 %v1541, %v1540
    %v1553 = vpack.c.b16 %v1543, %v1542
    %v1554 = vpack.c.b16 %v1545, %v1544
    %v1555 = vpack.c.b16 %v1547, %v1546
    %1564 = vmatprep.subr.bf16.mxu0 0
    %1565 = vmatpush1.bf16.msra.mxu0 %v1555
    %1566 = vmatprep.subr.bf16.mxu0 0
    %1567 = vmatpush1.bf16.msra.mxu0 %v1554
    %1568 = vmatprep.subr.bf16.mxu0 0
    %1569 = vmatpush1.bf16.msra.mxu0 %v1553
    %1570 = vmatprep.subr.bf16.mxu0 0
    %1571 = vmatpush1.bf16.msra.mxu0 %v1552
    %1572 = vmatprep.subr.bf16.mxu0 0
    %1573 = vmatpush1.bf16.msra.mxu0 %v1551
    %1574 = vmatprep.subr.bf16.mxu0 0
    %1575 = vmatpush1.bf16.msra.mxu0 %v1550
    %1576 = vmatprep.subr.bf16.mxu0 0
    %1577 = vmatpush1.bf16.msra.mxu0 %v1549
    %1578 = vmatprep.subr.bf16.mxu0 0
    %1579 = vmatpush1.bf16.msra.mxu0 %v1548
    %1580 = vmatprep.subr.bf16.mxu0 0
    %1581 = vmatpush2.bf16.msra.mxu0 0
    %1582 = vmatprep.subr.bf16.mxu0 0
    %1583 = vmatpush2.bf16.msra.mxu0 0
    %1584 = vmatprep.subr.bf16.mxu0 0
    %1585 = vmatpush2.bf16.msra.mxu0 0
    %1586 = vmatprep.subr.bf16.mxu0 0
    %1587 = vmatpush2.bf16.msra.mxu0 0
    %1588 = vmatprep.subr.bf16.mxu0 0
    %1589 = vmatpush2.bf16.msra.mxu0 0
    %1590 = vmatprep.subr.bf16.mxu0 0
    %1591 = vmatpush2.bf16.msra.mxu0 0
    %1592 = vmatprep.subr.bf16.mxu0 0
    %1593 = vmatpush2.bf16.msra.mxu0 0
    %1594 = vmatprep.subr.bf16.mxu0 0
    %1595 = vmatpush2.bf16.msra.mxu0 0
    %1596 = vmatprep.mubr.bf16.mxu0 0
    %1597 = vmatmul.mubr.bf16.gmra.mxu0 %v1492
    %v1598 = vpop.f32.mrf.mxu0
    %v1599 = vadd.f32 %v1514, %v1598
    %v1600 = vpop.f32.mrf.mxu0
    %v1601 = vpop.f32.mrf.mxu0
    %v1602 = vpop.f32.mrf.mxu0
    %1603 = vdwg.mxu0
    %v1604 = vlaneseq
    %v1605 = vand.u32 %v1604, 127
    %vm1606 = vcmp.lt.s32.totalorder %v1605, 10
    %v1607 = vsel %vm1606, %v1599, -1e+30
    %vm1608 = vcmask 1041408
    %v1609 = vsel %vm1608, %v1607, -inf
    %1610 = vmax.xlane.f32.xlu0 %v1609
    %v1611 = vpop.xlane.xlu0 %1610
    %v1612 = vsub.f32 %v1607, %v1611
    %v1613 = vmul.f32 %v1612, 1.442695
    %v1614 = vpow.pop %v1613
    %v1615 = vsel %vm1608, %v1614, 0.0
    %1616 = vadd.xlane.f32.xlu0 %v1615
    %v1617 = vpop.xlane.xlu0 %1616
    %v1618 = vlog2.pop %v1617
    %v1619 = vmul.f32 %v1618, 0.6931472
    %v1620 = vsub.f32 %v1612, %v1619
    %1621 = vst [vmem:[#allocation2] sm:$0x3] %v1620
    // Predicated region
    $region22: #{simple_cnn_forward.5} parent=1 // pred_check
      _
    $region23: #{simple_cnn_forward.5} parent=1 // pred_check_branch
      %1623 = sbr.rel (0) target = $region25
    $region24: #{simple_cnn_forward.5} parent=1 // pred_region
      %s1625 = ssub.s32 32, 32
      %1626 = vsyncadd [#allocation3], %s1625
      %s1628 = sshll.u32 [#allocation2], 4
      %s1629 = int_to_ptr.vmem [resolvable:$true] %s1628
      %1631 = dma.vmem_to_hbm [thread:$0]  %s1629, 32, %s5, [#allocation3]
    $region25: #{simple_cnn_forward.5} parent=1 // pred_fallthru
      _
    // Predicated region
    $region26: #{simple_cnn_forward.5} parent=1 // pred_check
      _
    $region27: #{simple_cnn_forward.5} parent=1 // pred_check_branch
      %1633 = sbr.rel (0) target = $region29
    $region28: #{simple_cnn_forward.5} parent=1 // pred_region
      %1634 = dma.done [#allocation3], 32
    $region29: #{simple_cnn_forward.5} parent=1 // pred_fallthru
      _
    %1635 = vsyncpa [#allocation3], 1

</llo_original>
